<compile_context>
chip_gen: v7x
topology: tpu7x:2x2x1
jax: 0.10.0
libtpu: 0.0.40
codegen_flags: <defaults>
</compile_context>

<pallas_src>
import functools

import numpy as np
import jax
import jax.numpy as jnp
from jax.experimental import pallas as pl
from jax.experimental.pallas import tpu as pltpu

LEAKY_SLOPE = 0.01  # nn.LeakyReLU default negative_slope


# --------------------------------------------------------------------------
# In-kernel helpers (operate on (C, H*W) f32 values)
# --------------------------------------------------------------------------
def _leaky(v):
    return jnp.where(v >= 0, v, LEAKY_SLOPE * v)


def _conv3x3_bn(x, wstack, bias, shift_ref, *, leaky):
    """3x3 conv (pad=1, stride=1) + folded BN (+ optional LeakyReLU).

    x:        (Cin, HW)        activations, spatial-in-lane
    wstack:   (9*Cout, Cin)    conv weights with BN scale folded in;
                               row k*Cout+co holds tap k of output channel co
    bias:     (Cout, 1)        folded BN shift
    shift_ref:(9, HW, HW) ref  0/1 shift + zero-pad-halo matrices
    """
    hw = x.shape[1]
    cout = wstack.shape[0] // 9

    # One small matmul applies all 9 taps' channel mixing at once.
    z = jnp.dot(wstack, x, preferred_element_type=jnp.float32)     # (9*Cout, HW)

    # Nine fat (K = HW) matmuls realize the spatial shifts + boundary zeros.
    out = None
    for k in range(9):
        zk = z[k * cout:(k + 1) * cout, :]                          # aligned slice
        t = jnp.dot(zk, shift_ref[k], preferred_element_type=jnp.float32)
        out = t if out is None else out + t
    out = out + bias
    return _leaky(out) if leaky else out


def _attn_residual(x, res, w1t, w2):
    """ChannelAttention (squeeze-excite) + residual add + LeakyReLU.

    x, res: (C, HW);  w1t: (C, C//r) = W1.T;  w2: (C, C//r).
    """
    s = jnp.mean(x, axis=1, keepdims=True)                 # (C, 1)   global avg pool
    h = jnp.sum(w1t * s, axis=0, keepdims=True)            # (1, C//r) 1x1 conv
    h = _leaky(h)
    g = jnp.sum(w2 * h, axis=1, keepdims=True)             # (C, 1)   1x1 conv
    g = 1.0 / (1.0 + jnp.exp(-g))                          # sigmoid
    return _leaky(x * g + res)                             # scale + residual + LeakyReLU


# --------------------------------------------------------------------------
# Fused kernel: one batch element per grid step, everything stays on-chip
# --------------------------------------------------------------------------
def _fused_kernel(x_ref,
                  w0_ref, b0_ref,
                  w1a_ref, b1a_ref, w1b_ref, b1b_ref, a1w1t_ref, a1w2_ref,
                  w2a_ref, b2a_ref, w2b_ref, b2b_ref, w2s_ref, b2s_ref,
                  a2w1t_ref, a2w2_ref,
                  shift1_ref, shift2_ref, pool1_ref, pool2_ref,
                  o_ref):
    x = x_ref[0]                                                        # (Cin, H*W)

    # ShallowConv: conv + BN + LeakyReLU
    a0 = _conv3x3_bn(x, w0_ref[...], b0_ref[...], shift1_ref, leaky=True)

    # d1: ResidualBlock(C1 -> C1, shortcut=True)
    h = _conv3x3_bn(a0, w1a_ref[...], b1a_ref[...], shift1_ref, leaky=True)
    h = _conv3x3_bn(h, w1b_ref[...], b1b_ref[...], shift1_ref, leaky=False)
    r1 = _attn_residual(h, a0, a1w1t_ref[...], a1w2_ref[...])

    # pool1: 2x2 average pool as a lane-dense matmul
    p1 = jnp.dot(r1, pool1_ref[...], preferred_element_type=jnp.float32)  # (C1, HW/4)

    # d2: ResidualBlock(C1 -> C2, shortcut=None -> conv+BN shortcut branch)
    g = _conv3x3_bn(p1, w2a_ref[...], b2a_ref[...], shift2_ref, leaky=True)
    g = _conv3x3_bn(g, w2b_ref[...], b2b_ref[...], shift2_ref, leaky=False)
    sc = _conv3x3_bn(p1, w2s_ref[...], b2s_ref[...], shift2_ref, leaky=False)
    r2 = _attn_residual(g, sc, a2w1t_ref[...], a2w2_ref[...])

    # pool2
    p2 = jnp.dot(r2, pool2_ref[...], preferred_element_type=jnp.float32)  # (C2, HW/16)

    o_ref[0] = p2.astype(o_ref.dtype)


# --------------------------------------------------------------------------
# Host-side parameter folding and constant matrices
# --------------------------------------------------------------------------
def _fold_conv(w_hwio, scale, shift):
    """(3,3,Cin,Cout) HWIO conv weight + BN scale/shift ->
    ((9*Cout, Cin) scale-folded weight stack, (Cout, 1) bias)."""
    kh, kw, _, cout = w_hwio.shape
    wstack = jnp.transpose(w_hwio, (0, 1, 3, 2)).reshape(kh * kw * cout, -1)
    wstack = wstack * jnp.tile(scale, kh * kw)[:, None]
    return wstack.astype(jnp.float32), shift[:, None].astype(jnp.float32)


def _shift_matrices(H, W):
    """S[k, q, p] = 1 iff output position p's tap k reads source position q
    (zero outside the image -> implements the 1-pixel zero padding)."""
    HW = H * W
    S = np.zeros((9, HW, HW), np.float32)
    k = 0
    for dy in (-1, 0, 1):
        for dx in (-1, 0, 1):
            for yi in range(H):
                for xi in range(W):
                    ys, xs = yi + dy, xi + dx
                    if 0 <= ys < H and 0 <= xs < W:
                        S[k, ys * W + xs, yi * W + xi] = 1.0
            k += 1
    return jnp.asarray(S)


def _pool_matrix(H, W):
    """(H*W, (H/2)*(W/2)) matrix implementing 2x2 average pooling."""
    Ho, Wo = H // 2, W // 2
    P = np.zeros((H * W, Ho * Wo), np.float32)
    for yi in range(H):
        for xi in range(W):
            P[yi * W + xi, (yi // 2) * Wo + (xi // 2)] = 0.25
    return jnp.asarray(P)


def _replicated_spec(shape):
    nd = len(shape)
    return pl.BlockSpec(tuple(shape), lambda n, _nd=nd: (0,) * _nd)


# --------------------------------------------------------------------------
# Full forward (single pallas_call)
# --------------------------------------------------------------------------
@jax.jit
def attr_channel_fusion(x_nchw, p):
    N, Cin, H, W = x_nchw.shape
    assert H % 4 == 0 and W % 4 == 0
    HW = H * W
    Hq, Wq = H // 4, W // 4
    C2 = p['w2a'].shape[-1]

    x_flat = x_nchw.reshape(N, Cin, HW).astype(jnp.float32)

    w0, b0 = _fold_conv(p['w0'], p['s0'], p['b0'])
    w1a, b1a = _fold_conv(p['w1a'], p['s1a'], p['b1a'])
    w1b, b1b = _fold_conv(p['w1b'], p['s1b'], p['b1b'])
    w2a, b2a = _fold_conv(p['w2a'], p['s2a'], p['b2a'])
    w2b, b2b = _fold_conv(p['w2b'], p['s2b'], p['b2b'])
    w2s, b2s = _fold_conv(p['w2s'], p['s2s'], p['b2s'])
    a1w1t = jnp.transpose(p['a1_w1'])          # (C1, C1//r)
    a1w2 = p['a1_w2']                          # (C1, C1//r)
    a2w1t = jnp.transpose(p['a2_w1'])          # (C2, C2//r)
    a2w2 = p['a2_w2']                          # (C2, C2//r)

    shift1 = _shift_matrices(H, W)             # (9, HW, HW)
    shift2 = _shift_matrices(H // 2, W // 2)   # (9, HW/4, HW/4)
    pool1 = _pool_matrix(H, W)                 # (HW, HW/4)
    pool2 = _pool_matrix(H // 2, W // 2)       # (HW/4, HW/16)

    weight_ops = (w0, b0, w1a, b1a, w1b, b1b, a1w1t, a1w2,
                  w2a, b2a, w2b, b2b, w2s, b2s, a2w1t, a2w2,
                  shift1, shift2, pool1, pool2)

    in_specs = [pl.BlockSpec((1, Cin, HW), lambda n: (n, 0, 0))]
    in_specs += [_replicated_spec(a.shape) for a in weight_ops]

    out = pl.pallas_call(
        _fused_kernel,
        out_shape=jax.ShapeDtypeStruct((N, C2, Hq * Wq), jnp.float32),
        grid=(N,),
        in_specs=in_specs,
        out_specs=pl.BlockSpec((1, C2, Hq * Wq), lambda n: (n, 0, 0)),
        compiler_params=pltpu.CompilerParams(
            dimension_semantics=("parallel",)),
    )(x_flat, *weight_ops)

    return out.reshape(N, C2, Hq, Wq)          # NCHW, same as the PyTorch module


# --------------------------------------------------------------------------
# Parameter init (deterministic, synthetic) and pure-JAX reference
# --------------------------------------------------------------------------
def init_params(cin, c1, c2, ratio, key):
    keys = iter(jax.random.split(key, 64))

    def conv_w(ci, co):
        return jax.random.normal(next(keys), (3, 3, ci, co), jnp.float32) * 0.1

    def bn(c):
        gamma = jax.random.uniform(next(keys), (c,), jnp.float32, 0.5, 1.5)
        beta = jax.random.normal(next(keys), (c,), jnp.float32) * 0.1
        mean = jax.random.normal(next(keys), (c,), jnp.float32) * 0.1
        var = jax.random.uniform(next(keys), (c,), jnp.float32, 0.5, 1.5)
        scale = gamma / jnp.sqrt(var + 1e-5)
        shift = beta - mean * scale
        return scale, shift

    p = {}
    p['w0'] = conv_w(cin, c1); p['s0'], p['b0'] = bn(c1)
    # d1: ResidualBlock(c1 -> c1, shortcut=True)
    p['w1a'] = conv_w(c1, c1); p['s1a'], p['b1a'] = bn(c1)
    p['w1b'] = conv_w(c1, c1); p['s1b'], p['b1b'] = bn(c1)
    p['a1_w1'] = jax.random.normal(next(keys), (c1 // ratio, c1), jnp.float32) * 0.3
    p['a1_w2'] = jax.random.normal(next(keys), (c1, c1 // ratio), jnp.float32) * 0.3
    # d2: ResidualBlock(c1 -> c2, shortcut=None -> block2 branch)
    p['w2a'] = conv_w(c1, c2); p['s2a'], p['b2a'] = bn(c2)
    p['w2b'] = conv_w(c2, c2); p['s2b'], p['b2b'] = bn(c2)
    p['a2_w1'] = jax.random.normal(next(keys), (c2 // ratio, c2), jnp.float32) * 0.3
    p['a2_w2'] = jax.random.normal(next(keys), (c2, c2 // ratio), jnp.float32) * 0.3
    p['w2s'] = conv_w(c1, c2); p['s2s'], p['b2s'] = bn(c2)
    return p


def reference_forward(x_nchw, p):
    x = jnp.transpose(x_nchw, (0, 2, 3, 1)).astype(jnp.float32)   # NHWC
    hi = jax.lax.Precision.HIGHEST

    def conv(x, w, s, b, leaky):
        y = jax.lax.conv_general_dilated(
            x, w, (1, 1), 'SAME',
            dimension_numbers=('NHWC', 'HWIO', 'NHWC'), precision=hi)
        y = y * s + b
        return jnp.where(y >= 0, y, LEAKY_SLOPE * y) if leaky else y

    def attn_res(x, res, w1, w2):
        s = jnp.mean(x, axis=(1, 2))                                # (N, C)
        h = jnp.einsum('nc,mc->nm', s, w1, precision=hi)
        h = jnp.where(h >= 0, h, LEAKY_SLOPE * h)
        g = jnp.einsum('nm,cm->nc', h, w2, precision=hi)
        g = jax.nn.sigmoid(g)[:, None, None, :]
        o = x * g + res
        return jnp.where(o >= 0, o, LEAKY_SLOPE * o)

    def pool(x):
        N, H, W, C = x.shape
        return x.reshape(N, H // 2, 2, W // 2, 2, C).mean(axis=(2, 4))

    a0 = conv(x, p['w0'], p['s0'], p['b0'], True)
    h = conv(a0, p['w1a'], p['s1a'], p['b1a'], True)
    h = conv(h, p['w1b'], p['s1b'], p['b1b'], False)
    h = attn_res(h, a0, p['a1_w1'], p['a1_w2'])
    h = pool(h)
    g = conv(h, p['w2a'], p['s2a'], p['b2a'], True)
    g = conv(g, p['w2b'], p['s2b'], p['b2b'], False)
    sc = conv(h, p['w2s'], p['s2s'], p['b2s'], False)
    g = attn_res(g, sc, p['a2_w1'], p['a2_w2'])
    g = pool(g)
    return jnp.transpose(g, (0, 3, 1, 2))                           # NCHW


if __name__ == "__main__":
    key = jax.random.PRNGKey(0)
    kx, kp = jax.random.split(key)

    # AttrChannelFusion(in_channel=4, out_channel1=8, out_channel2=16, ratio=4)
    N, Cin, H, W = 2, 4, 16, 16
    C1, C2, ratio = 8, 16, 4

    x = jax.random.normal(kx, (N, Cin, H, W), jnp.float32)          # NCHW, as in PyTorch
    params = init_params(Cin, C1, C2, ratio, kp)

    out = attr_channel_fusion(x, params)
    out = jax.block_until_ready(out)
    assert out.shape == (N, C2, H // 4, W // 4), out.shape

    ref = reference_forward(x, params)
    np.testing.assert_allclose(np.asarray(out), np.asarray(ref),
                               rtol=5e-3, atol=5e-3)
    print("KERNEL_OK")
</pallas_src>

<mosaic_0001>
module attributes {stable_mosaic.version = 11 : i64} {
  func.func @_fused_kernel(%arg0: i32, %arg1: memref<1x4x256xf32, #tpu.memory_space<vmem>>, %arg2: memref<72x4xf32, #tpu.memory_space<vmem>>, %arg3: memref<8x1xf32, #tpu.memory_space<vmem>>, %arg4: memref<72x8xf32, #tpu.memory_space<vmem>>, %arg5: memref<8x1xf32, #tpu.memory_space<vmem>>, %arg6: memref<72x8xf32, #tpu.memory_space<vmem>>, %arg7: memref<8x1xf32, #tpu.memory_space<vmem>>, %arg8: memref<8x2xf32, #tpu.memory_space<vmem>>, %arg9: memref<8x2xf32, #tpu.memory_space<vmem>>, %arg10: memref<144x8xf32, #tpu.memory_space<vmem>>, %arg11: memref<16x1xf32, #tpu.memory_space<vmem>>, %arg12: memref<144x16xf32, #tpu.memory_space<vmem>>, %arg13: memref<16x1xf32, #tpu.memory_space<vmem>>, %arg14: memref<144x8xf32, #tpu.memory_space<vmem>>, %arg15: memref<16x1xf32, #tpu.memory_space<vmem>>, %arg16: memref<16x4xf32, #tpu.memory_space<vmem>>, %arg17: memref<16x4xf32, #tpu.memory_space<vmem>>, %arg18: memref<9x256x256xf32, #tpu.memory_space<vmem>>, %arg19: memref<9x64x64xf32, #tpu.memory_space<vmem>>, %arg20: memref<256x64xf32, #tpu.memory_space<vmem>>, %arg21: memref<64x16xf32, #tpu.memory_space<vmem>>, %arg22: memref<1x16x16xf32, #tpu.memory_space<vmem>>) attributes {dimension_semantics = [#tpu.dimension_semantics<parallel>], iteration_bounds = array<i64: 2>, scalar_prefetch = 0 : i64, scratch_operands = 0 : i64, tpu.core_type = #tpu.core_type<tc>, window_params = [{transform_indices = @transform_0, window_bounds = array<i64: 1, 4, 256>}, {pipeline_mode = #tpu.pipeline_mode<synchronous>, transform_indices = @transform_1, window_bounds = array<i64: 72, 4>}, {pipeline_mode = #tpu.pipeline_mode<synchronous>, transform_indices = @transform_2, window_bounds = array<i64: 8, 1>}, {pipeline_mode = #tpu.pipeline_mode<synchronous>, transform_indices = @transform_3, window_bounds = array<i64: 72, 8>}, {pipeline_mode = #tpu.pipeline_mode<synchronous>, transform_indices = @transform_4, window_bounds = array<i64: 8, 1>}, {pipeline_mode = #tpu.pipeline_mode<synchronous>, transform_indices = @transform_5, window_bounds = array<i64: 72, 8>}, {pipeline_mode = #tpu.pipeline_mode<synchronous>, transform_indices = @transform_6, window_bounds = array<i64: 8, 1>}, {pipeline_mode = #tpu.pipeline_mode<synchronous>, transform_indices = @transform_7, window_bounds = array<i64: 8, 2>}, {pipeline_mode = #tpu.pipeline_mode<synchronous>, transform_indices = @transform_8, window_bounds = array<i64: 8, 2>}, {pipeline_mode = #tpu.pipeline_mode<synchronous>, transform_indices = @transform_9, window_bounds = array<i64: 144, 8>}, {pipeline_mode = #tpu.pipeline_mode<synchronous>, transform_indices = @transform_10, window_bounds = array<i64: 16, 1>}, {pipeline_mode = #tpu.pipeline_mode<synchronous>, transform_indices = @transform_11, window_bounds = array<i64: 144, 16>}, {pipeline_mode = #tpu.pipeline_mode<synchronous>, transform_indices = @transform_12, window_bounds = array<i64: 16, 1>}, {pipeline_mode = #tpu.pipeline_mode<synchronous>, transform_indices = @transform_13, window_bounds = array<i64: 144, 8>}, {pipeline_mode = #tpu.pipeline_mode<synchronous>, transform_indices = @transform_14, window_bounds = array<i64: 16, 1>}, {pipeline_mode = #tpu.pipeline_mode<synchronous>, transform_indices = @transform_15, window_bounds = array<i64: 16, 4>}, {pipeline_mode = #tpu.pipeline_mode<synchronous>, transform_indices = @transform_16, window_bounds = array<i64: 16, 4>}, {pipeline_mode = #tpu.pipeline_mode<synchronous>, transform_indices = @transform_17, window_bounds = array<i64: 9, 256, 256>}, {pipeline_mode = #tpu.pipeline_mode<synchronous>, transform_indices = @transform_18, window_bounds = array<i64: 9, 64, 64>}, {pipeline_mode = #tpu.pipeline_mode<synchronous>, transform_indices = @transform_19, window_bounds = array<i64: 256, 64>}, {pipeline_mode = #tpu.pipeline_mode<synchronous>, transform_indices = @transform_20, window_bounds = array<i64: 64, 16>}, {transform_indices = @transform_21, window_bounds = array<i64: 1, 16, 16>}]} {
    %c0 = arith.constant 0 : index
    %c0_0 = arith.constant 0 : index
    %c0_1 = arith.constant 0 : index
    %0 = vector.load %arg1[%c0, %c0_0, %c0_1] : memref<1x4x256xf32, #tpu.memory_space<vmem>>, vector<1x4x256xf32>
    %1 = vector.shape_cast %0 : vector<1x4x256xf32> to vector<4x256xf32>
    %c0_2 = arith.constant 0 : index
    %c0_3 = arith.constant 0 : index
    %2 = vector.load %arg2[%c0_2, %c0_3] : memref<72x4xf32, #tpu.memory_space<vmem>>, vector<72x4xf32>
    %c0_4 = arith.constant 0 : index
    %c0_5 = arith.constant 0 : index
    %3 = vector.load %arg3[%c0_4, %c0_5] : memref<8x1xf32, #tpu.memory_space<vmem>>, vector<8x1xf32>
    %cst = arith.constant dense<0.000000e+00> : vector<72x256xf32>
    %4 = tpu.matmul %2, %1, %cst {dimension_numbers = #tpu.dot_dimension_numbers<[1], [0], [0], [1], [0, 0, 1, 1], [], []>} : vector<72x4xf32>, vector<4x256xf32>, vector<72x256xf32> -> vector<72x256xf32>
    %5 = vector.extract_strided_slice %4 {offsets = [0, 0], sizes = [8, 256], strides = [1, 1]} : vector<72x256xf32> to vector<8x256xf32>
    %c0_6 = arith.constant 0 : index
    %c0_7 = arith.constant 0 : index
    %c0_8 = arith.constant 0 : index
    %6 = vector.load %arg18[%c0_6, %c0_7, %c0_8] : memref<9x256x256xf32, #tpu.memory_space<vmem>>, vector<1x256x256xf32>
    %7 = vector.shape_cast %6 : vector<1x256x256xf32> to vector<256x256xf32>
    %cst_9 = arith.constant dense<0.000000e+00> : vector<8x256xf32>
    %8 = tpu.matmul %5, %7, %cst_9 {dimension_numbers = #tpu.dot_dimension_numbers<[1], [0], [0], [1], [0, 0, 1, 1], [], []>} : vector<8x256xf32>, vector<256x256xf32>, vector<8x256xf32> -> vector<8x256xf32>
    %9 = vector.extract_strided_slice %4 {offsets = [8, 0], sizes = [8, 256], strides = [1, 1]} : vector<72x256xf32> to vector<8x256xf32>
    %c1 = arith.constant 1 : index
    %c0_10 = arith.constant 0 : index
    %c0_11 = arith.constant 0 : index
    %10 = vector.load %arg18[%c1, %c0_10, %c0_11] : memref<9x256x256xf32, #tpu.memory_space<vmem>>, vector<1x256x256xf32>
    %11 = vector.shape_cast %10 : vector<1x256x256xf32> to vector<256x256xf32>
    %cst_12 = arith.constant dense<0.000000e+00> : vector<8x256xf32>
    %12 = tpu.matmul %9, %11, %cst_12 {dimension_numbers = #tpu.dot_dimension_numbers<[1], [0], [0], [1], [0, 0, 1, 1], [], []>} : vector<8x256xf32>, vector<256x256xf32>, vector<8x256xf32> -> vector<8x256xf32>
    %13 = arith.addf %8, %12 : vector<8x256xf32>
    %14 = vector.extract_strided_slice %4 {offsets = [16, 0], sizes = [8, 256], strides = [1, 1]} : vector<72x256xf32> to vector<8x256xf32>
    %c2 = arith.constant 2 : index
    %c0_13 = arith.constant 0 : index
    %c0_14 = arith.constant 0 : index
    %15 = vector.load %arg18[%c2, %c0_13, %c0_14] : memref<9x256x256xf32, #tpu.memory_space<vmem>>, vector<1x256x256xf32>
    %16 = vector.shape_cast %15 : vector<1x256x256xf32> to vector<256x256xf32>
    %cst_15 = arith.constant dense<0.000000e+00> : vector<8x256xf32>
    %17 = tpu.matmul %14, %16, %cst_15 {dimension_numbers = #tpu.dot_dimension_numbers<[1], [0], [0], [1], [0, 0, 1, 1], [], []>} : vector<8x256xf32>, vector<256x256xf32>, vector<8x256xf32> -> vector<8x256xf32>
    %18 = arith.addf %13, %17 : vector<8x256xf32>
    %19 = vector.extract_strided_slice %4 {offsets = [24, 0], sizes = [8, 256], strides = [1, 1]} : vector<72x256xf32> to vector<8x256xf32>
    %c3 = arith.constant 3 : index
    %c0_16 = arith.constant 0 : index
    %c0_17 = arith.constant 0 : index
    %20 = vector.load %arg18[%c3, %c0_16, %c0_17] : memref<9x256x256xf32, #tpu.memory_space<vmem>>, vector<1x256x256xf32>
    %21 = vector.shape_cast %20 : vector<1x256x256xf32> to vector<256x256xf32>
    %cst_18 = arith.constant dense<0.000000e+00> : vector<8x256xf32>
    %22 = tpu.matmul %19, %21, %cst_18 {dimension_numbers = #tpu.dot_dimension_numbers<[1], [0], [0], [1], [0, 0, 1, 1], [], []>} : vector<8x256xf32>, vector<256x256xf32>, vector<8x256xf32> -> vector<8x256xf32>
    %23 = arith.addf %18, %22 : vector<8x256xf32>
    %24 = vector.extract_strided_slice %4 {offsets = [32, 0], sizes = [8, 256], strides = [1, 1]} : vector<72x256xf32> to vector<8x256xf32>
    %c4 = arith.constant 4 : index
    %c0_19 = arith.constant 0 : index
    %c0_20 = arith.constant 0 : index
    %25 = vector.load %arg18[%c4, %c0_19, %c0_20] : memref<9x256x256xf32, #tpu.memory_space<vmem>>, vector<1x256x256xf32>
    %26 = vector.shape_cast %25 : vector<1x256x256xf32> to vector<256x256xf32>
    %cst_21 = arith.constant dense<0.000000e+00> : vector<8x256xf32>
    %27 = tpu.matmul %24, %26, %cst_21 {dimension_numbers = #tpu.dot_dimension_numbers<[1], [0], [0], [1], [0, 0, 1, 1], [], []>} : vector<8x256xf32>, vector<256x256xf32>, vector<8x256xf32> -> vector<8x256xf32>
    %28 = arith.addf %23, %27 : vector<8x256xf32>
    %29 = vector.extract_strided_slice %4 {offsets = [40, 0], sizes = [8, 256], strides = [1, 1]} : vector<72x256xf32> to vector<8x256xf32>
    %c5 = arith.constant 5 : index
    %c0_22 = arith.constant 0 : index
    %c0_23 = arith.constant 0 : index
    %30 = vector.load %arg18[%c5, %c0_22, %c0_23] : memref<9x256x256xf32, #tpu.memory_space<vmem>>, vector<1x256x256xf32>
    %31 = vector.shape_cast %30 : vector<1x256x256xf32> to vector<256x256xf32>
    %cst_24 = arith.constant dense<0.000000e+00> : vector<8x256xf32>
    %32 = tpu.matmul %29, %31, %cst_24 {dimension_numbers = #tpu.dot_dimension_numbers<[1], [0], [0], [1], [0, 0, 1, 1], [], []>} : vector<8x256xf32>, vector<256x256xf32>, vector<8x256xf32> -> vector<8x256xf32>
    %33 = arith.addf %28, %32 : vector<8x256xf32>
    %34 = vector.extract_strided_slice %4 {offsets = [48, 0], sizes = [8, 256], strides = [1, 1]} : vector<72x256xf32> to vector<8x256xf32>
    %c6 = arith.constant 6 : index
    %c0_25 = arith.constant 0 : index
    %c0_26 = arith.constant 0 : index
    %35 = vector.load %arg18[%c6, %c0_25, %c0_26] : memref<9x256x256xf32, #tpu.memory_space<vmem>>, vector<1x256x256xf32>
    %36 = vector.shape_cast %35 : vector<1x256x256xf32> to vector<256x256xf32>
    %cst_27 = arith.constant dense<0.000000e+00> : vector<8x256xf32>
    %37 = tpu.matmul %34, %36, %cst_27 {dimension_numbers = #tpu.dot_dimension_numbers<[1], [0], [0], [1], [0, 0, 1, 1], [], []>} : vector<8x256xf32>, vector<256x256xf32>, vector<8x256xf32> -> vector<8x256xf32>
    %38 = arith.addf %33, %37 : vector<8x256xf32>
    %39 = vector.extract_strided_slice %4 {offsets = [56, 0], sizes = [8, 256], strides = [1, 1]} : vector<72x256xf32> to vector<8x256xf32>
    %c7 = arith.constant 7 : index
    %c0_28 = arith.constant 0 : index
    %c0_29 = arith.constant 0 : index
    %40 = vector.load %arg18[%c7, %c0_28, %c0_29] : memref<9x256x256xf32, #tpu.memory_space<vmem>>, vector<1x256x256xf32>
    %41 = vector.shape_cast %40 : vector<1x256x256xf32> to vector<256x256xf32>
    %cst_30 = arith.constant dense<0.000000e+00> : vector<8x256xf32>
    %42 = tpu.matmul %39, %41, %cst_30 {dimension_numbers = #tpu.dot_dimension_numbers<[1], [0], [0], [1], [0, 0, 1, 1], [], []>} : vector<8x256xf32>, vector<256x256xf32>, vector<8x256xf32> -> vector<8x256xf32>
    %43 = arith.addf %38, %42 : vector<8x256xf32>
    %44 = vector.extract_strided_slice %4 {offsets = [64, 0], sizes = [8, 256], strides = [1, 1]} : vector<72x256xf32> to vector<8x256xf32>
    %c8 = arith.constant 8 : index
    %c0_31 = arith.constant 0 : index
    %c0_32 = arith.constant 0 : index
    %45 = vector.load %arg18[%c8, %c0_31, %c0_32] : memref<9x256x256xf32, #tpu.memory_space<vmem>>, vector<1x256x256xf32>
    %46 = vector.shape_cast %45 : vector<1x256x256xf32> to vector<256x256xf32>
    %cst_33 = arith.constant dense<0.000000e+00> : vector<8x256xf32>
    %47 = tpu.matmul %44, %46, %cst_33 {dimension_numbers = #tpu.dot_dimension_numbers<[1], [0], [0], [1], [0, 0, 1, 1], [], []>} : vector<8x256xf32>, vector<256x256xf32>, vector<8x256xf32> -> vector<8x256xf32>
    %48 = arith.addf %43, %47 : vector<8x256xf32>
    %49 = vector.broadcast %3 : vector<8x1xf32> to vector<8x256xf32>
    %50 = arith.addf %48, %49 : vector<8x256xf32>
    %cst_34 = arith.constant 0.000000e+00 : f32
    %51 = vector.broadcast %cst_34 : f32 to vector<8x256xf32>
    %52 = arith.cmpf oge, %50, %51 : vector<8x256xf32>
    %cst_35 = arith.constant 0.00999999977 : f32
    %53 = vector.broadcast %cst_35 : f32 to vector<8x256xf32>
    %54 = arith.mulf %53, %50 : vector<8x256xf32>
    %55 = arith.select %52, %50, %54 : vector<8x256xi1>, vector<8x256xf32>
    %c0_36 = arith.constant 0 : index
    %c0_37 = arith.constant 0 : index
    %56 = vector.load %arg4[%c0_36, %c0_37] : memref<72x8xf32, #tpu.memory_space<vmem>>, vector<72x8xf32>
    %c0_38 = arith.constant 0 : index
    %c0_39 = arith.constant 0 : index
    %57 = vector.load %arg5[%c0_38, %c0_39] : memref<8x1xf32, #tpu.memory_space<vmem>>, vector<8x1xf32>
    %cst_40 = arith.constant dense<0.000000e+00> : vector<72x256xf32>
    %58 = tpu.matmul %56, %55, %cst_40 {dimension_numbers = #tpu.dot_dimension_numbers<[1], [0], [0], [1], [0, 0, 1, 1], [], []>} : vector<72x8xf32>, vector<8x256xf32>, vector<72x256xf32> -> vector<72x256xf32>
    %59 = vector.extract_strided_slice %58 {offsets = [0, 0], sizes = [8, 256], strides = [1, 1]} : vector<72x256xf32> to vector<8x256xf32>
    %c0_41 = arith.constant 0 : index
    %c0_42 = arith.constant 0 : index
    %c0_43 = arith.constant 0 : index
    %60 = vector.load %arg18[%c0_41, %c0_42, %c0_43] : memref<9x256x256xf32, #tpu.memory_space<vmem>>, vector<1x256x256xf32>
    %61 = vector.shape_cast %60 : vector<1x256x256xf32> to vector<256x256xf32>
    %cst_44 = arith.constant dense<0.000000e+00> : vector<8x256xf32>
    %62 = tpu.matmul %59, %61, %cst_44 {dimension_numbers = #tpu.dot_dimension_numbers<[1], [0], [0], [1], [0, 0, 1, 1], [], []>} : vector<8x256xf32>, vector<256x256xf32>, vector<8x256xf32> -> vector<8x256xf32>
    %63 = vector.extract_strided_slice %58 {offsets = [8, 0], sizes = [8, 256], strides = [1, 1]} : vector<72x256xf32> to vector<8x256xf32>
    %c1_45 = arith.constant 1 : index
    %c0_46 = arith.constant 0 : index
    %c0_47 = arith.constant 0 : index
    %64 = vector.load %arg18[%c1_45, %c0_46, %c0_47] : memref<9x256x256xf32, #tpu.memory_space<vmem>>, vector<1x256x256xf32>
    %65 = vector.shape_cast %64 : vector<1x256x256xf32> to vector<256x256xf32>
    %cst_48 = arith.constant dense<0.000000e+00> : vector<8x256xf32>
    %66 = tpu.matmul %63, %65, %cst_48 {dimension_numbers = #tpu.dot_dimension_numbers<[1], [0], [0], [1], [0, 0, 1, 1], [], []>} : vector<8x256xf32>, vector<256x256xf32>, vector<8x256xf32> -> vector<8x256xf32>
    %67 = arith.addf %62, %66 : vector<8x256xf32>
    %68 = vector.extract_strided_slice %58 {offsets = [16, 0], sizes = [8, 256], strides = [1, 1]} : vector<72x256xf32> to vector<8x256xf32>
    %c2_49 = arith.constant 2 : index
    %c0_50 = arith.constant 0 : index
    %c0_51 = arith.constant 0 : index
    %69 = vector.load %arg18[%c2_49, %c0_50, %c0_51] : memref<9x256x256xf32, #tpu.memory_space<vmem>>, vector<1x256x256xf32>
    %70 = vector.shape_cast %69 : vector<1x256x256xf32> to vector<256x256xf32>
    %cst_52 = arith.constant dense<0.000000e+00> : vector<8x256xf32>
    %71 = tpu.matmul %68, %70, %cst_52 {dimension_numbers = #tpu.dot_dimension_numbers<[1], [0], [0], [1], [0, 0, 1, 1], [], []>} : vector<8x256xf32>, vector<256x256xf32>, vector<8x256xf32> -> vector<8x256xf32>
    %72 = arith.addf %67, %71 : vector<8x256xf32>
    %73 = vector.extract_strided_slice %58 {offsets = [24, 0], sizes = [8, 256], strides = [1, 1]} : vector<72x256xf32> to vector<8x256xf32>
    %c3_53 = arith.constant 3 : index
    %c0_54 = arith.constant 0 : index
    %c0_55 = arith.constant 0 : index
    %74 = vector.load %arg18[%c3_53, %c0_54, %c0_55] : memref<9x256x256xf32, #tpu.memory_space<vmem>>, vector<1x256x256xf32>
    %75 = vector.shape_cast %74 : vector<1x256x256xf32> to vector<256x256xf32>
    %cst_56 = arith.constant dense<0.000000e+00> : vector<8x256xf32>
    %76 = tpu.matmul %73, %75, %cst_56 {dimension_numbers = #tpu.dot_dimension_numbers<[1], [0], [0], [1], [0, 0, 1, 1], [], []>} : vector<8x256xf32>, vector<256x256xf32>, vector<8x256xf32> -> vector<8x256xf32>
    %77 = arith.addf %72, %76 : vector<8x256xf32>
    %78 = vector.extract_strided_slice %58 {offsets = [32, 0], sizes = [8, 256], strides = [1, 1]} : vector<72x256xf32> to vector<8x256xf32>
    %c4_57 = arith.constant 4 : index
    %c0_58 = arith.constant 0 : index
    %c0_59 = arith.constant 0 : index
    %79 = vector.load %arg18[%c4_57, %c0_58, %c0_59] : memref<9x256x256xf32, #tpu.memory_space<vmem>>, vector<1x256x256xf32>
    %80 = vector.shape_cast %79 : vector<1x256x256xf32> to vector<256x256xf32>
    %cst_60 = arith.constant dense<0.000000e+00> : vector<8x256xf32>
    %81 = tpu.matmul %78, %80, %cst_60 {dimension_numbers = #tpu.dot_dimension_numbers<[1], [0], [0], [1], [0, 0, 1, 1], [], []>} : vector<8x256xf32>, vector<256x256xf32>, vector<8x256xf32> -> vector<8x256xf32>
    %82 = arith.addf %77, %81 : vector<8x256xf32>
    %83 = vector.extract_strided_slice %58 {offsets = [40, 0], sizes = [8, 256], strides = [1, 1]} : vector<72x256xf32> to vector<8x256xf32>
    %c5_61 = arith.constant 5 : index
    %c0_62 = arith.constant 0 : index
    %c0_63 = arith.constant 0 : index
    %84 = vector.load %arg18[%c5_61, %c0_62, %c0_63] : memref<9x256x256xf32, #tpu.memory_space<vmem>>, vector<1x256x256xf32>
    %85 = vector.shape_cast %84 : vector<1x256x256xf32> to vector<256x256xf32>
    %cst_64 = arith.constant dense<0.000000e+00> : vector<8x256xf32>
    %86 = tpu.matmul %83, %85, %cst_64 {dimension_numbers = #tpu.dot_dimension_numbers<[1], [0], [0], [1], [0, 0, 1, 1], [], []>} : vector<8x256xf32>, vector<256x256xf32>, vector<8x256xf32> -> vector<8x256xf32>
    %87 = arith.addf %82, %86 : vector<8x256xf32>
    %88 = vector.extract_strided_slice %58 {offsets = [48, 0], sizes = [8, 256], strides = [1, 1]} : vector<72x256xf32> to vector<8x256xf32>
    %c6_65 = arith.constant 6 : index
    %c0_66 = arith.constant 0 : index
    %c0_67 = arith.constant 0 : index
    %89 = vector.load %arg18[%c6_65, %c0_66, %c0_67] : memref<9x256x256xf32, #tpu.memory_space<vmem>>, vector<1x256x256xf32>
    %90 = vector.shape_cast %89 : vector<1x256x256xf32> to vector<256x256xf32>
    %cst_68 = arith.constant dense<0.000000e+00> : vector<8x256xf32>
    %91 = tpu.matmul %88, %90, %cst_68 {dimension_numbers = #tpu.dot_dimension_numbers<[1], [0], [0], [1], [0, 0, 1, 1], [], []>} : vector<8x256xf32>, vector<256x256xf32>, vector<8x256xf32> -> vector<8x256xf32>
    %92 = arith.addf %87, %91 : vector<8x256xf32>
    %93 = vector.extract_strided_slice %58 {offsets = [56, 0], sizes = [8, 256], strides = [1, 1]} : vector<72x256xf32> to vector<8x256xf32>
    %c7_69 = arith.constant 7 : index
    %c0_70 = arith.constant 0 : index
    %c0_71 = arith.constant 0 : index
    %94 = vector.load %arg18[%c7_69, %c0_70, %c0_71] : memref<9x256x256xf32, #tpu.memory_space<vmem>>, vector<1x256x256xf32>
    %95 = vector.shape_cast %94 : vector<1x256x256xf32> to vector<256x256xf32>
    %cst_72 = arith.constant dense<0.000000e+00> : vector<8x256xf32>
    %96 = tpu.matmul %93, %95, %cst_72 {dimension_numbers = #tpu.dot_dimension_numbers<[1], [0], [0], [1], [0, 0, 1, 1], [], []>} : vector<8x256xf32>, vector<256x256xf32>, vector<8x256xf32> -> vector<8x256xf32>
    %97 = arith.addf %92, %96 : vector<8x256xf32>
    %98 = vector.extract_strided_slice %58 {offsets = [64, 0], sizes = [8, 256], strides = [1, 1]} : vector<72x256xf32> to vector<8x256xf32>
    %c8_73 = arith.constant 8 : index
    %c0_74 = arith.constant 0 : index
    %c0_75 = arith.constant 0 : index
    %99 = vector.load %arg18[%c8_73, %c0_74, %c0_75] : memref<9x256x256xf32, #tpu.memory_space<vmem>>, vector<1x256x256xf32>
    %100 = vector.shape_cast %99 : vector<1x256x256xf32> to vector<256x256xf32>
    %cst_76 = arith.constant dense<0.000000e+00> : vector<8x256xf32>
    %101 = tpu.matmul %98, %100, %cst_76 {dimension_numbers = #tpu.dot_dimension_numbers<[1], [0], [0], [1], [0, 0, 1, 1], [], []>} : vector<8x256xf32>, vector<256x256xf32>, vector<8x256xf32> -> vector<8x256xf32>
    %102 = arith.addf %97, %101 : vector<8x256xf32>
    %103 = vector.broadcast %57 : vector<8x1xf32> to vector<8x256xf32>
    %104 = arith.addf %102, %103 : vector<8x256xf32>
    %cst_77 = arith.constant 0.000000e+00 : f32
    %105 = vector.broadcast %cst_77 : f32 to vector<8x256xf32>
    %106 = arith.cmpf oge, %104, %105 : vector<8x256xf32>
    %cst_78 = arith.constant 0.00999999977 : f32
    %107 = vector.broadcast %cst_78 : f32 to vector<8x256xf32>
    %108 = arith.mulf %107, %104 : vector<8x256xf32>
    %109 = arith.select %106, %104, %108 : vector<8x256xi1>, vector<8x256xf32>
    %c0_79 = arith.constant 0 : index
    %c0_80 = arith.constant 0 : index
    %110 = vector.load %arg6[%c0_79, %c0_80] : memref<72x8xf32, #tpu.memory_space<vmem>>, vector<72x8xf32>
    %c0_81 = arith.constant 0 : index
    %c0_82 = arith.constant 0 : index
    %111 = vector.load %arg7[%c0_81, %c0_82] : memref<8x1xf32, #tpu.memory_space<vmem>>, vector<8x1xf32>
    %cst_83 = arith.constant dense<0.000000e+00> : vector<72x256xf32>
    %112 = tpu.matmul %110, %109, %cst_83 {dimension_numbers = #tpu.dot_dimension_numbers<[1], [0], [0], [1], [0, 0, 1, 1], [], []>} : vector<72x8xf32>, vector<8x256xf32>, vector<72x256xf32> -> vector<72x256xf32>
    %113 = vector.extract_strided_slice %112 {offsets = [0, 0], sizes = [8, 256], strides = [1, 1]} : vector<72x256xf32> to vector<8x256xf32>
    %c0_84 = arith.constant 0 : index
    %c0_85 = arith.constant 0 : index
    %c0_86 = arith.constant 0 : index
    %114 = vector.load %arg18[%c0_84, %c0_85, %c0_86] : memref<9x256x256xf32, #tpu.memory_space<vmem>>, vector<1x256x256xf32>
    %115 = vector.shape_cast %114 : vector<1x256x256xf32> to vector<256x256xf32>
    %cst_87 = arith.constant dense<0.000000e+00> : vector<8x256xf32>
    %116 = tpu.matmul %113, %115, %cst_87 {dimension_numbers = #tpu.dot_dimension_numbers<[1], [0], [0], [1], [0, 0, 1, 1], [], []>} : vector<8x256xf32>, vector<256x256xf32>, vector<8x256xf32> -> vector<8x256xf32>
    %117 = vector.extract_strided_slice %112 {offsets = [8, 0], sizes = [8, 256], strides = [1, 1]} : vector<72x256xf32> to vector<8x256xf32>
    %c1_88 = arith.constant 1 : index
    %c0_89 = arith.constant 0 : index
    %c0_90 = arith.constant 0 : index
    %118 = vector.load %arg18[%c1_88, %c0_89, %c0_90] : memref<9x256x256xf32, #tpu.memory_space<vmem>>, vector<1x256x256xf32>
    %119 = vector.shape_cast %118 : vector<1x256x256xf32> to vector<256x256xf32>
    %cst_91 = arith.constant dense<0.000000e+00> : vector<8x256xf32>
    %120 = tpu.matmul %117, %119, %cst_91 {dimension_numbers = #tpu.dot_dimension_numbers<[1], [0], [0], [1], [0, 0, 1, 1], [], []>} : vector<8x256xf32>, vector<256x256xf32>, vector<8x256xf32> -> vector<8x256xf32>
    %121 = arith.addf %116, %120 : vector<8x256xf32>
    %122 = vector.extract_strided_slice %112 {offsets = [16, 0], sizes = [8, 256], strides = [1, 1]} : vector<72x256xf32> to vector<8x256xf32>
    %c2_92 = arith.constant 2 : index
    %c0_93 = arith.constant 0 : index
    %c0_94 = arith.constant 0 : index
    %123 = vector.load %arg18[%c2_92, %c0_93, %c0_94] : memref<9x256x256xf32, #tpu.memory_space<vmem>>, vector<1x256x256xf32>
    %124 = vector.shape_cast %123 : vector<1x256x256xf32> to vector<256x256xf32>
    %cst_95 = arith.constant dense<0.000000e+00> : vector<8x256xf32>
    %125 = tpu.matmul %122, %124, %cst_95 {dimension_numbers = #tpu.dot_dimension_numbers<[1], [0], [0], [1], [0, 0, 1, 1], [], []>} : vector<8x256xf32>, vector<256x256xf32>, vector<8x256xf32> -> vector<8x256xf32>
    %126 = arith.addf %121, %125 : vector<8x256xf32>
    %127 = vector.extract_strided_slice %112 {offsets = [24, 0], sizes = [8, 256], strides = [1, 1]} : vector<72x256xf32> to vector<8x256xf32>
    %c3_96 = arith.constant 3 : index
    %c0_97 = arith.constant 0 : index
    %c0_98 = arith.constant 0 : index
    %128 = vector.load %arg18[%c3_96, %c0_97, %c0_98] : memref<9x256x256xf32, #tpu.memory_space<vmem>>, vector<1x256x256xf32>
    %129 = vector.shape_cast %128 : vector<1x256x256xf32> to vector<256x256xf32>
    %cst_99 = arith.constant dense<0.000000e+00> : vector<8x256xf32>
    %130 = tpu.matmul %127, %129, %cst_99 {dimension_numbers = #tpu.dot_dimension_numbers<[1], [0], [0], [1], [0, 0, 1, 1], [], []>} : vector<8x256xf32>, vector<256x256xf32>, vector<8x256xf32> -> vector<8x256xf32>
    %131 = arith.addf %126, %130 : vector<8x256xf32>
    %132 = vector.extract_strided_slice %112 {offsets = [32, 0], sizes = [8, 256], strides = [1, 1]} : vector<72x256xf32> to vector<8x256xf32>
    %c4_100 = arith.constant 4 : index
    %c0_101 = arith.constant 0 : index
    %c0_102 = arith.constant 0 : index
    %133 = vector.load %arg18[%c4_100, %c0_101, %c0_102] : memref<9x256x256xf32, #tpu.memory_space<vmem>>, vector<1x256x256xf32>
    %134 = vector.shape_cast %133 : vector<1x256x256xf32> to vector<256x256xf32>
    %cst_103 = arith.constant dense<0.000000e+00> : vector<8x256xf32>
    %135 = tpu.matmul %132, %134, %cst_103 {dimension_numbers = #tpu.dot_dimension_numbers<[1], [0], [0], [1], [0, 0, 1, 1], [], []>} : vector<8x256xf32>, vector<256x256xf32>, vector<8x256xf32> -> vector<8x256xf32>
    %136 = arith.addf %131, %135 : vector<8x256xf32>
    %137 = vector.extract_strided_slice %112 {offsets = [40, 0], sizes = [8, 256], strides = [1, 1]} : vector<72x256xf32> to vector<8x256xf32>
    %c5_104 = arith.constant 5 : index
    %c0_105 = arith.constant 0 : index
    %c0_106 = arith.constant 0 : index
    %138 = vector.load %arg18[%c5_104, %c0_105, %c0_106] : memref<9x256x256xf32, #tpu.memory_space<vmem>>, vector<1x256x256xf32>
    %139 = vector.shape_cast %138 : vector<1x256x256xf32> to vector<256x256xf32>
    %cst_107 = arith.constant dense<0.000000e+00> : vector<8x256xf32>
    %140 = tpu.matmul %137, %139, %cst_107 {dimension_numbers = #tpu.dot_dimension_numbers<[1], [0], [0], [1], [0, 0, 1, 1], [], []>} : vector<8x256xf32>, vector<256x256xf32>, vector<8x256xf32> -> vector<8x256xf32>
    %141 = arith.addf %136, %140 : vector<8x256xf32>
    %142 = vector.extract_strided_slice %112 {offsets = [48, 0], sizes = [8, 256], strides = [1, 1]} : vector<72x256xf32> to vector<8x256xf32>
    %c6_108 = arith.constant 6 : index
    %c0_109 = arith.constant 0 : index
    %c0_110 = arith.constant 0 : index
    %143 = vector.load %arg18[%c6_108, %c0_109, %c0_110] : memref<9x256x256xf32, #tpu.memory_space<vmem>>, vector<1x256x256xf32>
    %144 = vector.shape_cast %143 : vector<1x256x256xf32> to vector<256x256xf32>
    %cst_111 = arith.constant dense<0.000000e+00> : vector<8x256xf32>
    %145 = tpu.matmul %142, %144, %cst_111 {dimension_numbers = #tpu.dot_dimension_numbers<[1], [0], [0], [1], [0, 0, 1, 1], [], []>} : vector<8x256xf32>, vector<256x256xf32>, vector<8x256xf32> -> vector<8x256xf32>
    %146 = arith.addf %141, %145 : vector<8x256xf32>
    %147 = vector.extract_strided_slice %112 {offsets = [56, 0], sizes = [8, 256], strides = [1, 1]} : vector<72x256xf32> to vector<8x256xf32>
    %c7_112 = arith.constant 7 : index
    %c0_113 = arith.constant 0 : index
    %c0_114 = arith.constant 0 : index
    %148 = vector.load %arg18[%c7_112, %c0_113, %c0_114] : memref<9x256x256xf32, #tpu.memory_space<vmem>>, vector<1x256x256xf32>
    %149 = vector.shape_cast %148 : vector<1x256x256xf32> to vector<256x256xf32>
    %cst_115 = arith.constant dense<0.000000e+00> : vector<8x256xf32>
    %150 = tpu.matmul %147, %149, %cst_115 {dimension_numbers = #tpu.dot_dimension_numbers<[1], [0], [0], [1], [0, 0, 1, 1], [], []>} : vector<8x256xf32>, vector<256x256xf32>, vector<8x256xf32> -> vector<8x256xf32>
    %151 = arith.addf %146, %150 : vector<8x256xf32>
    %152 = vector.extract_strided_slice %112 {offsets = [64, 0], sizes = [8, 256], strides = [1, 1]} : vector<72x256xf32> to vector<8x256xf32>
    %c8_116 = arith.constant 8 : index
    %c0_117 = arith.constant 0 : index
    %c0_118 = arith.constant 0 : index
    %153 = vector.load %arg18[%c8_116, %c0_117, %c0_118] : memref<9x256x256xf32, #tpu.memory_space<vmem>>, vector<1x256x256xf32>
    %154 = vector.shape_cast %153 : vector<1x256x256xf32> to vector<256x256xf32>
    %cst_119 = arith.constant dense<0.000000e+00> : vector<8x256xf32>
    %155 = tpu.matmul %152, %154, %cst_119 {dimension_numbers = #tpu.dot_dimension_numbers<[1], [0], [0], [1], [0, 0, 1, 1], [], []>} : vector<8x256xf32>, vector<256x256xf32>, vector<8x256xf32> -> vector<8x256xf32>
    %156 = arith.addf %151, %155 : vector<8x256xf32>
    %157 = vector.broadcast %111 : vector<8x1xf32> to vector<8x256xf32>
    %158 = arith.addf %156, %157 : vector<8x256xf32>
    %c0_120 = arith.constant 0 : index
    %c0_121 = arith.constant 0 : index
    %159 = vector.load %arg8[%c0_120, %c0_121] : memref<8x2xf32, #tpu.memory_space<vmem>>, vector<8x2xf32>
    %c0_122 = arith.constant 0 : index
    %c0_123 = arith.constant 0 : index
    %160 = vector.load %arg9[%c0_122, %c0_123] : memref<8x2xf32, #tpu.memory_space<vmem>>, vector<8x2xf32>
    %cst_124 = arith.constant dense<0.000000e+00> : vector<8xf32>
    %161 = vector.multi_reduction <add>, %158, %cst_124 [1] : vector<8x256xf32> to vector<8xf32>
    %162 = vector.shape_cast %161 : vector<8xf32> to vector<8x1xf32>
    %cst_125 = arith.constant 2.560000e+02 : f32
    %163 = vector.broadcast %cst_125 : f32 to vector<8x1xf32>
    %164 = arith.divf %162, %163 : vector<8x1xf32>
    %165 = vector.broadcast %164 : vector<8x1xf32> to vector<8x2xf32>
    %166 = arith.mulf %159, %165 : vector<8x2xf32>
    %cst_126 = arith.constant dense<0.000000e+00> : vector<2xf32>
    %167 = vector.multi_reduction <add>, %166, %cst_126 [0] : vector<8x2xf32> to vector<2xf32>
    %168 = vector.shape_cast %167 : vector<2xf32> to vector<1x2xf32>
    %cst_127 = arith.constant 0.000000e+00 : f32
    %169 = vector.broadcast %cst_127 : f32 to vector<1x2xf32>
    %170 = arith.cmpf oge, %168, %169 : vector<1x2xf32>
    %cst_128 = arith.constant 0.00999999977 : f32
    %171 = vector.broadcast %cst_128 : f32 to vector<1x2xf32>
    %172 = arith.mulf %171, %168 : vector<1x2xf32>
    %173 = arith.select %170, %168, %172 : vector<1x2xi1>, vector<1x2xf32>
    %174 = vector.broadcast %173 : vector<1x2xf32> to vector<8x2xf32>
    %175 = arith.mulf %160, %174 : vector<8x2xf32>
    %cst_129 = arith.constant dense<0.000000e+00> : vector<8xf32>
    %176 = vector.multi_reduction <add>, %175, %cst_129 [1] : vector<8x2xf32> to vector<8xf32>
    %177 = vector.shape_cast %176 : vector<8xf32> to vector<8x1xf32>
    %cst_130 = arith.constant 0.000000e+00 : f32
    %178 = vector.broadcast %cst_130 : f32 to vector<8x1xf32>
    %179 = arith.subf %178, %177 : vector<8x1xf32>
    %180 = math.exp %179 : vector<8x1xf32>
    %cst_131 = arith.constant 1.000000e+00 : f32
    %181 = vector.broadcast %cst_131 : f32 to vector<8x1xf32>
    %182 = arith.addf %181, %180 : vector<8x1xf32>
    %cst_132 = arith.constant 1.000000e+00 : f32
    %183 = vector.broadcast %cst_132 : f32 to vector<8x1xf32>
    %184 = arith.divf %183, %182 : vector<8x1xf32>
    %185 = vector.broadcast %184 : vector<8x1xf32> to vector<8x256xf32>
    %186 = arith.mulf %158, %185 : vector<8x256xf32>
    %187 = arith.addf %186, %55 : vector<8x256xf32>
    %cst_133 = arith.constant 0.000000e+00 : f32
    %188 = vector.broadcast %cst_133 : f32 to vector<8x256xf32>
    %189 = arith.cmpf oge, %187, %188 : vector<8x256xf32>
    %cst_134 = arith.constant 0.00999999977 : f32
    %190 = vector.broadcast %cst_134 : f32 to vector<8x256xf32>
    %191 = arith.mulf %190, %187 : vector<8x256xf32>
    %192 = arith.select %189, %187, %191 : vector<8x256xi1>, vector<8x256xf32>
    %c0_135 = arith.constant 0 : index
    %c0_136 = arith.constant 0 : index
    %193 = vector.load %arg20[%c0_135, %c0_136] : memref<256x64xf32, #tpu.memory_space<vmem>>, vector<256x64xf32>
    %cst_137 = arith.constant dense<0.000000e+00> : vector<8x64xf32>
    %194 = tpu.matmul %192, %193, %cst_137 {dimension_numbers = #tpu.dot_dimension_numbers<[1], [0], [0], [1], [0, 0, 1, 1], [], []>} : vector<8x256xf32>, vector<256x64xf32>, vector<8x64xf32> -> vector<8x64xf32>
    %c0_138 = arith.constant 0 : index
    %c0_139 = arith.constant 0 : index
    %195 = vector.load %arg10[%c0_138, %c0_139] : memref<144x8xf32, #tpu.memory_space<vmem>>, vector<144x8xf32>
    %c0_140 = arith.constant 0 : index
    %c0_141 = arith.constant 0 : index
    %196 = vector.load %arg11[%c0_140, %c0_141] : memref<16x1xf32, #tpu.memory_space<vmem>>, vector<16x1xf32>
    %cst_142 = arith.constant dense<0.000000e+00> : vector<144x64xf32>
    %197 = tpu.matmul %195, %194, %cst_142 {dimension_numbers = #tpu.dot_dimension_numbers<[1], [0], [0], [1], [0, 0, 1, 1], [], []>} : vector<144x8xf32>, vector<8x64xf32>, vector<144x64xf32> -> vector<144x64xf32>
    %198 = vector.extract_strided_slice %197 {offsets = [0, 0], sizes = [16, 64], strides = [1, 1]} : vector<144x64xf32> to vector<16x64xf32>
    %c0_143 = arith.constant 0 : index
    %c0_144 = arith.constant 0 : index
    %c0_145 = arith.constant 0 : index
    %199 = vector.load %arg19[%c0_143, %c0_144, %c0_145] : memref<9x64x64xf32, #tpu.memory_space<vmem>>, vector<1x64x64xf32>
    %200 = vector.shape_cast %199 : vector<1x64x64xf32> to vector<64x64xf32>
    %cst_146 = arith.constant dense<0.000000e+00> : vector<16x64xf32>
    %201 = tpu.matmul %198, %200, %cst_146 {dimension_numbers = #tpu.dot_dimension_numbers<[1], [0], [0], [1], [0, 0, 1, 1], [], []>} : vector<16x64xf32>, vector<64x64xf32>, vector<16x64xf32> -> vector<16x64xf32>
    %202 = vector.extract_strided_slice %197 {offsets = [16, 0], sizes = [16, 64], strides = [1, 1]} : vector<144x64xf32> to vector<16x64xf32>
    %c1_147 = arith.constant 1 : index
    %c0_148 = arith.constant 0 : index
    %c0_149 = arith.constant 0 : index
    %203 = vector.load %arg19[%c1_147, %c0_148, %c0_149] : memref<9x64x64xf32, #tpu.memory_space<vmem>>, vector<1x64x64xf32>
    %204 = vector.shape_cast %203 : vector<1x64x64xf32> to vector<64x64xf32>
    %cst_150 = arith.constant dense<0.000000e+00> : vector<16x64xf32>
    %205 = tpu.matmul %202, %204, %cst_150 {dimension_numbers = #tpu.dot_dimension_numbers<[1], [0], [0], [1], [0, 0, 1, 1], [], []>} : vector<16x64xf32>, vector<64x64xf32>, vector<16x64xf32> -> vector<16x64xf32>
    %206 = arith.addf %201, %205 : vector<16x64xf32>
    %207 = vector.extract_strided_slice %197 {offsets = [32, 0], sizes = [16, 64], strides = [1, 1]} : vector<144x64xf32> to vector<16x64xf32>
    %c2_151 = arith.constant 2 : index
    %c0_152 = arith.constant 0 : index
    %c0_153 = arith.constant 0 : index
    %208 = vector.load %arg19[%c2_151, %c0_152, %c0_153] : memref<9x64x64xf32, #tpu.memory_space<vmem>>, vector<1x64x64xf32>
    %209 = vector.shape_cast %208 : vector<1x64x64xf32> to vector<64x64xf32>
    %cst_154 = arith.constant dense<0.000000e+00> : vector<16x64xf32>
    %210 = tpu.matmul %207, %209, %cst_154 {dimension_numbers = #tpu.dot_dimension_numbers<[1], [0], [0], [1], [0, 0, 1, 1], [], []>} : vector<16x64xf32>, vector<64x64xf32>, vector<16x64xf32> -> vector<16x64xf32>
    %211 = arith.addf %206, %210 : vector<16x64xf32>
    %212 = vector.extract_strided_slice %197 {offsets = [48, 0], sizes = [16, 64], strides = [1, 1]} : vector<144x64xf32> to vector<16x64xf32>
    %c3_155 = arith.constant 3 : index
    %c0_156 = arith.constant 0 : index
    %c0_157 = arith.constant 0 : index
    %213 = vector.load %arg19[%c3_155, %c0_156, %c0_157] : memref<9x64x64xf32, #tpu.memory_space<vmem>>, vector<1x64x64xf32>
    %214 = vector.shape_cast %213 : vector<1x64x64xf32> to vector<64x64xf32>
    %cst_158 = arith.constant dense<0.000000e+00> : vector<16x64xf32>
    %215 = tpu.matmul %212, %214, %cst_158 {dimension_numbers = #tpu.dot_dimension_numbers<[1], [0], [0], [1], [0, 0, 1, 1], [], []>} : vector<16x64xf32>, vector<64x64xf32>, vector<16x64xf32> -> vector<16x64xf32>
    %216 = arith.addf %211, %215 : vector<16x64xf32>
    %217 = vector.extract_strided_slice %197 {offsets = [64, 0], sizes = [16, 64], strides = [1, 1]} : vector<144x64xf32> to vector<16x64xf32>
    %c4_159 = arith.constant 4 : index
    %c0_160 = arith.constant 0 : index
    %c0_161 = arith.constant 0 : index
    %218 = vector.load %arg19[%c4_159, %c0_160, %c0_161] : memref<9x64x64xf32, #tpu.memory_space<vmem>>, vector<1x64x64xf32>
    %219 = vector.shape_cast %218 : vector<1x64x64xf32> to vector<64x64xf32>
    %cst_162 = arith.constant dense<0.000000e+00> : vector<16x64xf32>
    %220 = tpu.matmul %217, %219, %cst_162 {dimension_numbers = #tpu.dot_dimension_numbers<[1], [0], [0], [1], [0, 0, 1, 1], [], []>} : vector<16x64xf32>, vector<64x64xf32>, vector<16x64xf32> -> vector<16x64xf32>
    %221 = arith.addf %216, %220 : vector<16x64xf32>
    %222 = vector.extract_strided_slice %197 {offsets = [80, 0], sizes = [16, 64], strides = [1, 1]} : vector<144x64xf32> to vector<16x64xf32>
    %c5_163 = arith.constant 5 : index
    %c0_164 = arith.constant 0 : index
    %c0_165 = arith.constant 0 : index
    %223 = vector.load %arg19[%c5_163, %c0_164, %c0_165] : memref<9x64x64xf32, #tpu.memory_space<vmem>>, vector<1x64x64xf32>
    %224 = vector.shape_cast %223 : vector<1x64x64xf32> to vector<64x64xf32>
    %cst_166 = arith.constant dense<0.000000e+00> : vector<16x64xf32>
    %225 = tpu.matmul %222, %224, %cst_166 {dimension_numbers = #tpu.dot_dimension_numbers<[1], [0], [0], [1], [0, 0, 1, 1], [], []>} : vector<16x64xf32>, vector<64x64xf32>, vector<16x64xf32> -> vector<16x64xf32>
    %226 = arith.addf %221, %225 : vector<16x64xf32>
    %227 = vector.extract_strided_slice %197 {offsets = [96, 0], sizes = [16, 64], strides = [1, 1]} : vector<144x64xf32> to vector<16x64xf32>
    %c6_167 = arith.constant 6 : index
    %c0_168 = arith.constant 0 : index
    %c0_169 = arith.constant 0 : index
    %228 = vector.load %arg19[%c6_167, %c0_168, %c0_169] : memref<9x64x64xf32, #tpu.memory_space<vmem>>, vector<1x64x64xf32>
    %229 = vector.shape_cast %228 : vector<1x64x64xf32> to vector<64x64xf32>
    %cst_170 = arith.constant dense<0.000000e+00> : vector<16x64xf32>
    %230 = tpu.matmul %227, %229, %cst_170 {dimension_numbers = #tpu.dot_dimension_numbers<[1], [0], [0], [1], [0, 0, 1, 1], [], []>} : vector<16x64xf32>, vector<64x64xf32>, vector<16x64xf32> -> vector<16x64xf32>
    %231 = arith.addf %226, %230 : vector<16x64xf32>
    %232 = vector.extract_strided_slice %197 {offsets = [112, 0], sizes = [16, 64], strides = [1, 1]} : vector<144x64xf32> to vector<16x64xf32>
    %c7_171 = arith.constant 7 : index
    %c0_172 = arith.constant 0 : index
    %c0_173 = arith.constant 0 : index
    %233 = vector.load %arg19[%c7_171, %c0_172, %c0_173] : memref<9x64x64xf32, #tpu.memory_space<vmem>>, vector<1x64x64xf32>
    %234 = vector.shape_cast %233 : vector<1x64x64xf32> to vector<64x64xf32>
    %cst_174 = arith.constant dense<0.000000e+00> : vector<16x64xf32>
    %235 = tpu.matmul %232, %234, %cst_174 {dimension_numbers = #tpu.dot_dimension_numbers<[1], [0], [0], [1], [0, 0, 1, 1], [], []>} : vector<16x64xf32>, vector<64x64xf32>, vector<16x64xf32> -> vector<16x64xf32>
    %236 = arith.addf %231, %235 : vector<16x64xf32>
    %237 = vector.extract_strided_slice %197 {offsets = [128, 0], sizes = [16, 64], strides = [1, 1]} : vector<144x64xf32> to vector<16x64xf32>
    %c8_175 = arith.constant 8 : index
    %c0_176 = arith.constant 0 : index
    %c0_177 = arith.constant 0 : index
    %238 = vector.load %arg19[%c8_175, %c0_176, %c0_177] : memref<9x64x64xf32, #tpu.memory_space<vmem>>, vector<1x64x64xf32>
    %239 = vector.shape_cast %238 : vector<1x64x64xf32> to vector<64x64xf32>
    %cst_178 = arith.constant dense<0.000000e+00> : vector<16x64xf32>
    %240 = tpu.matmul %237, %239, %cst_178 {dimension_numbers = #tpu.dot_dimension_numbers<[1], [0], [0], [1], [0, 0, 1, 1], [], []>} : vector<16x64xf32>, vector<64x64xf32>, vector<16x64xf32> -> vector<16x64xf32>
    %241 = arith.addf %236, %240 : vector<16x64xf32>
    %242 = vector.broadcast %196 : vector<16x1xf32> to vector<16x64xf32>
    %243 = arith.addf %241, %242 : vector<16x64xf32>
    %cst_179 = arith.constant 0.000000e+00 : f32
    %244 = vector.broadcast %cst_179 : f32 to vector<16x64xf32>
    %245 = arith.cmpf oge, %243, %244 : vector<16x64xf32>
    %cst_180 = arith.constant 0.00999999977 : f32
    %246 = vector.broadcast %cst_180 : f32 to vector<16x64xf32>
    %247 = arith.mulf %246, %243 : vector<16x64xf32>
    %248 = arith.select %245, %243, %247 : vector<16x64xi1>, vector<16x64xf32>
    %c0_181 = arith.constant 0 : index
    %c0_182 = arith.constant 0 : index
    %249 = vector.load %arg12[%c0_181, %c0_182] : memref<144x16xf32, #tpu.memory_space<vmem>>, vector<144x16xf32>
    %c0_183 = arith.constant 0 : index
    %c0_184 = arith.constant 0 : index
    %250 = vector.load %arg13[%c0_183, %c0_184] : memref<16x1xf32, #tpu.memory_space<vmem>>, vector<16x1xf32>
    %cst_185 = arith.constant dense<0.000000e+00> : vector<144x64xf32>
    %251 = tpu.matmul %249, %248, %cst_185 {dimension_numbers = #tpu.dot_dimension_numbers<[1], [0], [0], [1], [0, 0, 1, 1], [], []>} : vector<144x16xf32>, vector<16x64xf32>, vector<144x64xf32> -> vector<144x64xf32>
    %252 = vector.extract_strided_slice %251 {offsets = [0, 0], sizes = [16, 64], strides = [1, 1]} : vector<144x64xf32> to vector<16x64xf32>
    %c0_186 = arith.constant 0 : index
    %c0_187 = arith.constant 0 : index
    %c0_188 = arith.constant 0 : index
    %253 = vector.load %arg19[%c0_186, %c0_187, %c0_188] : memref<9x64x64xf32, #tpu.memory_space<vmem>>, vector<1x64x64xf32>
    %254 = vector.shape_cast %253 : vector<1x64x64xf32> to vector<64x64xf32>
    %cst_189 = arith.constant dense<0.000000e+00> : vector<16x64xf32>
    %255 = tpu.matmul %252, %254, %cst_189 {dimension_numbers = #tpu.dot_dimension_numbers<[1], [0], [0], [1], [0, 0, 1, 1], [], []>} : vector<16x64xf32>, vector<64x64xf32>, vector<16x64xf32> -> vector<16x64xf32>
    %256 = vector.extract_strided_slice %251 {offsets = [16, 0], sizes = [16, 64], strides = [1, 1]} : vector<144x64xf32> to vector<16x64xf32>
    %c1_190 = arith.constant 1 : index
    %c0_191 = arith.constant 0 : index
    %c0_192 = arith.constant 0 : index
    %257 = vector.load %arg19[%c1_190, %c0_191, %c0_192] : memref<9x64x64xf32, #tpu.memory_space<vmem>>, vector<1x64x64xf32>
    %258 = vector.shape_cast %257 : vector<1x64x64xf32> to vector<64x64xf32>
    %cst_193 = arith.constant dense<0.000000e+00> : vector<16x64xf32>
    %259 = tpu.matmul %256, %258, %cst_193 {dimension_numbers = #tpu.dot_dimension_numbers<[1], [0], [0], [1], [0, 0, 1, 1], [], []>} : vector<16x64xf32>, vector<64x64xf32>, vector<16x64xf32> -> vector<16x64xf32>
    %260 = arith.addf %255, %259 : vector<16x64xf32>
    %261 = vector.extract_strided_slice %251 {offsets = [32, 0], sizes = [16, 64], strides = [1, 1]} : vector<144x64xf32> to vector<16x64xf32>
    %c2_194 = arith.constant 2 : index
    %c0_195 = arith.constant 0 : index
    %c0_196 = arith.constant 0 : index
    %262 = vector.load %arg19[%c2_194, %c0_195, %c0_196] : memref<9x64x64xf32, #tpu.memory_space<vmem>>, vector<1x64x64xf32>
    %263 = vector.shape_cast %262 : vector<1x64x64xf32> to vector<64x64xf32>
    %cst_197 = arith.constant dense<0.000000e+00> : vector<16x64xf32>
    %264 = tpu.matmul %261, %263, %cst_197 {dimension_numbers = #tpu.dot_dimension_numbers<[1], [0], [0], [1], [0, 0, 1, 1], [], []>} : vector<16x64xf32>, vector<64x64xf32>, vector<16x64xf32> -> vector<16x64xf32>
    %265 = arith.addf %260, %264 : vector<16x64xf32>
    %266 = vector.extract_strided_slice %251 {offsets = [48, 0], sizes = [16, 64], strides = [1, 1]} : vector<144x64xf32> to vector<16x64xf32>
    %c3_198 = arith.constant 3 : index
    %c0_199 = arith.constant 0 : index
    %c0_200 = arith.constant 0 : index
    %267 = vector.load %arg19[%c3_198, %c0_199, %c0_200] : memref<9x64x64xf32, #tpu.memory_space<vmem>>, vector<1x64x64xf32>
    %268 = vector.shape_cast %267 : vector<1x64x64xf32> to vector<64x64xf32>
    %cst_201 = arith.constant dense<0.000000e+00> : vector<16x64xf32>
    %269 = tpu.matmul %266, %268, %cst_201 {dimension_numbers = #tpu.dot_dimension_numbers<[1], [0], [0], [1], [0, 0, 1, 1], [], []>} : vector<16x64xf32>, vector<64x64xf32>, vector<16x64xf32> -> vector<16x64xf32>
    %270 = arith.addf %265, %269 : vector<16x64xf32>
    %271 = vector.extract_strided_slice %251 {offsets = [64, 0], sizes = [16, 64], strides = [1, 1]} : vector<144x64xf32> to vector<16x64xf32>
    %c4_202 = arith.constant 4 : index
    %c0_203 = arith.constant 0 : index
    %c0_204 = arith.constant 0 : index
    %272 = vector.load %arg19[%c4_202, %c0_203, %c0_204] : memref<9x64x64xf32, #tpu.memory_space<vmem>>, vector<1x64x64xf32>
    %273 = vector.shape_cast %272 : vector<1x64x64xf32> to vector<64x64xf32>
    %cst_205 = arith.constant dense<0.000000e+00> : vector<16x64xf32>
    %274 = tpu.matmul %271, %273, %cst_205 {dimension_numbers = #tpu.dot_dimension_numbers<[1], [0], [0], [1], [0, 0, 1, 1], [], []>} : vector<16x64xf32>, vector<64x64xf32>, vector<16x64xf32> -> vector<16x64xf32>
    %275 = arith.addf %270, %274 : vector<16x64xf32>
    %276 = vector.extract_strided_slice %251 {offsets = [80, 0], sizes = [16, 64], strides = [1, 1]} : vector<144x64xf32> to vector<16x64xf32>
    %c5_206 = arith.constant 5 : index
    %c0_207 = arith.constant 0 : index
    %c0_208 = arith.constant 0 : index
    %277 = vector.load %arg19[%c5_206, %c0_207, %c0_208] : memref<9x64x64xf32, #tpu.memory_space<vmem>>, vector<1x64x64xf32>
    %278 = vector.shape_cast %277 : vector<1x64x64xf32> to vector<64x64xf32>
    %cst_209 = arith.constant dense<0.000000e+00> : vector<16x64xf32>
    %279 = tpu.matmul %276, %278, %cst_209 {dimension_numbers = #tpu.dot_dimension_numbers<[1], [0], [0], [1], [0, 0, 1, 1], [], []>} : vector<16x64xf32>, vector<64x64xf32>, vector<16x64xf32> -> vector<16x64xf32>
    %280 = arith.addf %275, %279 : vector<16x64xf32>
    %281 = vector.extract_strided_slice %251 {offsets = [96, 0], sizes = [16, 64], strides = [1, 1]} : vector<144x64xf32> to vector<16x64xf32>
    %c6_210 = arith.constant 6 : index
    %c0_211 = arith.constant 0 : index
    %c0_212 = arith.constant 0 : index
    %282 = vector.load %arg19[%c6_210, %c0_211, %c0_212] : memref<9x64x64xf32, #tpu.memory_space<vmem>>, vector<1x64x64xf32>
    %283 = vector.shape_cast %282 : vector<1x64x64xf32> to vector<64x64xf32>
    %cst_213 = arith.constant dense<0.000000e+00> : vector<16x64xf32>
    %284 = tpu.matmul %281, %283, %cst_213 {dimension_numbers = #tpu.dot_dimension_numbers<[1], [0], [0], [1], [0, 0, 1, 1], [], []>} : vector<16x64xf32>, vector<64x64xf32>, vector<16x64xf32> -> vector<16x64xf32>
    %285 = arith.addf %280, %284 : vector<16x64xf32>
    %286 = vector.extract_strided_slice %251 {offsets = [112, 0], sizes = [16, 64], strides = [1, 1]} : vector<144x64xf32> to vector<16x64xf32>
    %c7_214 = arith.constant 7 : index
    %c0_215 = arith.constant 0 : index
    %c0_216 = arith.constant 0 : index
    %287 = vector.load %arg19[%c7_214, %c0_215, %c0_216] : memref<9x64x64xf32, #tpu.memory_space<vmem>>, vector<1x64x64xf32>
    %288 = vector.shape_cast %287 : vector<1x64x64xf32> to vector<64x64xf32>
    %cst_217 = arith.constant dense<0.000000e+00> : vector<16x64xf32>
    %289 = tpu.matmul %286, %288, %cst_217 {dimension_numbers = #tpu.dot_dimension_numbers<[1], [0], [0], [1], [0, 0, 1, 1], [], []>} : vector<16x64xf32>, vector<64x64xf32>, vector<16x64xf32> -> vector<16x64xf32>
    %290 = arith.addf %285, %289 : vector<16x64xf32>
    %291 = vector.extract_strided_slice %251 {offsets = [128, 0], sizes = [16, 64], strides = [1, 1]} : vector<144x64xf32> to vector<16x64xf32>
    %c8_218 = arith.constant 8 : index
    %c0_219 = arith.constant 0 : index
    %c0_220 = arith.constant 0 : index
    %292 = vector.load %arg19[%c8_218, %c0_219, %c0_220] : memref<9x64x64xf32, #tpu.memory_space<vmem>>, vector<1x64x64xf32>
    %293 = vector.shape_cast %292 : vector<1x64x64xf32> to vector<64x64xf32>
    %cst_221 = arith.constant dense<0.000000e+00> : vector<16x64xf32>
    %294 = tpu.matmul %291, %293, %cst_221 {dimension_numbers = #tpu.dot_dimension_numbers<[1], [0], [0], [1], [0, 0, 1, 1], [], []>} : vector<16x64xf32>, vector<64x64xf32>, vector<16x64xf32> -> vector<16x64xf32>
    %295 = arith.addf %290, %294 : vector<16x64xf32>
    %296 = vector.broadcast %250 : vector<16x1xf32> to vector<16x64xf32>
    %297 = arith.addf %295, %296 : vector<16x64xf32>
    %c0_222 = arith.constant 0 : index
    %c0_223 = arith.constant 0 : index
    %298 = vector.load %arg14[%c0_222, %c0_223] : memref<144x8xf32, #tpu.memory_space<vmem>>, vector<144x8xf32>
    %c0_224 = arith.constant 0 : index
    %c0_225 = arith.constant 0 : index
    %299 = vector.load %arg15[%c0_224, %c0_225] : memref<16x1xf32, #tpu.memory_space<vmem>>, vector<16x1xf32>
    %cst_226 = arith.constant dense<0.000000e+00> : vector<144x64xf32>
    %300 = tpu.matmul %298, %194, %cst_226 {dimension_numbers = #tpu.dot_dimension_numbers<[1], [0], [0], [1], [0, 0, 1, 1], [], []>} : vector<144x8xf32>, vector<8x64xf32>, vector<144x64xf32> -> vector<144x64xf32>
    %301 = vector.extract_strided_slice %300 {offsets = [0, 0], sizes = [16, 64], strides = [1, 1]} : vector<144x64xf32> to vector<16x64xf32>
    %c0_227 = arith.constant 0 : index
    %c0_228 = arith.constant 0 : index
    %c0_229 = arith.constant 0 : index
    %302 = vector.load %arg19[%c0_227, %c0_228, %c0_229] : memref<9x64x64xf32, #tpu.memory_space<vmem>>, vector<1x64x64xf32>
    %303 = vector.shape_cast %302 : vector<1x64x64xf32> to vector<64x64xf32>
    %cst_230 = arith.constant dense<0.000000e+00> : vector<16x64xf32>
    %304 = tpu.matmul %301, %303, %cst_230 {dimension_numbers = #tpu.dot_dimension_numbers<[1], [0], [0], [1], [0, 0, 1, 1], [], []>} : vector<16x64xf32>, vector<64x64xf32>, vector<16x64xf32> -> vector<16x64xf32>
    %305 = vector.extract_strided_slice %300 {offsets = [16, 0], sizes = [16, 64], strides = [1, 1]} : vector<144x64xf32> to vector<16x64xf32>
    %c1_231 = arith.constant 1 : index
    %c0_232 = arith.constant 0 : index
    %c0_233 = arith.constant 0 : index
    %306 = vector.load %arg19[%c1_231, %c0_232, %c0_233] : memref<9x64x64xf32, #tpu.memory_space<vmem>>, vector<1x64x64xf32>
    %307 = vector.shape_cast %306 : vector<1x64x64xf32> to vector<64x64xf32>
    %cst_234 = arith.constant dense<0.000000e+00> : vector<16x64xf32>
    %308 = tpu.matmul %305, %307, %cst_234 {dimension_numbers = #tpu.dot_dimension_numbers<[1], [0], [0], [1], [0, 0, 1, 1], [], []>} : vector<16x64xf32>, vector<64x64xf32>, vector<16x64xf32> -> vector<16x64xf32>
    %309 = arith.addf %304, %308 : vector<16x64xf32>
    %310 = vector.extract_strided_slice %300 {offsets = [32, 0], sizes = [16, 64], strides = [1, 1]} : vector<144x64xf32> to vector<16x64xf32>
    %c2_235 = arith.constant 2 : index
    %c0_236 = arith.constant 0 : index
    %c0_237 = arith.constant 0 : index
    %311 = vector.load %arg19[%c2_235, %c0_236, %c0_237] : memref<9x64x64xf32, #tpu.memory_space<vmem>>, vector<1x64x64xf32>
    %312 = vector.shape_cast %311 : vector<1x64x64xf32> to vector<64x64xf32>
    %cst_238 = arith.constant dense<0.000000e+00> : vector<16x64xf32>
    %313 = tpu.matmul %310, %312, %cst_238 {dimension_numbers = #tpu.dot_dimension_numbers<[1], [0], [0], [1], [0, 0, 1, 1], [], []>} : vector<16x64xf32>, vector<64x64xf32>, vector<16x64xf32> -> vector<16x64xf32>
    %314 = arith.addf %309, %313 : vector<16x64xf32>
    %315 = vector.extract_strided_slice %300 {offsets = [48, 0], sizes = [16, 64], strides = [1, 1]} : vector<144x64xf32> to vector<16x64xf32>
    %c3_239 = arith.constant 3 : index
    %c0_240 = arith.constant 0 : index
    %c0_241 = arith.constant 0 : index
    %316 = vector.load %arg19[%c3_239, %c0_240, %c0_241] : memref<9x64x64xf32, #tpu.memory_space<vmem>>, vector<1x64x64xf32>
    %317 = vector.shape_cast %316 : vector<1x64x64xf32> to vector<64x64xf32>
    %cst_242 = arith.constant dense<0.000000e+00> : vector<16x64xf32>
    %318 = tpu.matmul %315, %317, %cst_242 {dimension_numbers = #tpu.dot_dimension_numbers<[1], [0], [0], [1], [0, 0, 1, 1], [], []>} : vector<16x64xf32>, vector<64x64xf32>, vector<16x64xf32> -> vector<16x64xf32>
    %319 = arith.addf %314, %318 : vector<16x64xf32>
    %320 = vector.extract_strided_slice %300 {offsets = [64, 0], sizes = [16, 64], strides = [1, 1]} : vector<144x64xf32> to vector<16x64xf32>
    %c4_243 = arith.constant 4 : index
    %c0_244 = arith.constant 0 : index
    %c0_245 = arith.constant 0 : index
    %321 = vector.load %arg19[%c4_243, %c0_244, %c0_245] : memref<9x64x64xf32, #tpu.memory_space<vmem>>, vector<1x64x64xf32>
    %322 = vector.shape_cast %321 : vector<1x64x64xf32> to vector<64x64xf32>
    %cst_246 = arith.constant dense<0.000000e+00> : vector<16x64xf32>
    %323 = tpu.matmul %320, %322, %cst_246 {dimension_numbers = #tpu.dot_dimension_numbers<[1], [0], [0], [1], [0, 0, 1, 1], [], []>} : vector<16x64xf32>, vector<64x64xf32>, vector<16x64xf32> -> vector<16x64xf32>
    %324 = arith.addf %319, %323 : vector<16x64xf32>
    %325 = vector.extract_strided_slice %300 {offsets = [80, 0], sizes = [16, 64], strides = [1, 1]} : vector<144x64xf32> to vector<16x64xf32>
    %c5_247 = arith.constant 5 : index
    %c0_248 = arith.constant 0 : index
    %c0_249 = arith.constant 0 : index
    %326 = vector.load %arg19[%c5_247, %c0_248, %c0_249] : memref<9x64x64xf32, #tpu.memory_space<vmem>>, vector<1x64x64xf32>
    %327 = vector.shape_cast %326 : vector<1x64x64xf32> to vector<64x64xf32>
    %cst_250 = arith.constant dense<0.000000e+00> : vector<16x64xf32>
    %328 = tpu.matmul %325, %327, %cst_250 {dimension_numbers = #tpu.dot_dimension_numbers<[1], [0], [0], [1], [0, 0, 1, 1], [], []>} : vector<16x64xf32>, vector<64x64xf32>, vector<16x64xf32> -> vector<16x64xf32>
    %329 = arith.addf %324, %328 : vector<16x64xf32>
    %330 = vector.extract_strided_slice %300 {offsets = [96, 0], sizes = [16, 64], strides = [1, 1]} : vector<144x64xf32> to vector<16x64xf32>
    %c6_251 = arith.constant 6 : index
    %c0_252 = arith.constant 0 : index
    %c0_253 = arith.constant 0 : index
    %331 = vector.load %arg19[%c6_251, %c0_252, %c0_253] : memref<9x64x64xf32, #tpu.memory_space<vmem>>, vector<1x64x64xf32>
    %332 = vector.shape_cast %331 : vector<1x64x64xf32> to vector<64x64xf32>
    %cst_254 = arith.constant dense<0.000000e+00> : vector<16x64xf32>
    %333 = tpu.matmul %330, %332, %cst_254 {dimension_numbers = #tpu.dot_dimension_numbers<[1], [0], [0], [1], [0, 0, 1, 1], [], []>} : vector<16x64xf32>, vector<64x64xf32>, vector<16x64xf32> -> vector<16x64xf32>
    %334 = arith.addf %329, %333 : vector<16x64xf32>
    %335 = vector.extract_strided_slice %300 {offsets = [112, 0], sizes = [16, 64], strides = [1, 1]} : vector<144x64xf32> to vector<16x64xf32>
    %c7_255 = arith.constant 7 : index
    %c0_256 = arith.constant 0 : index
    %c0_257 = arith.constant 0 : index
    %336 = vector.load %arg19[%c7_255, %c0_256, %c0_257] : memref<9x64x64xf32, #tpu.memory_space<vmem>>, vector<1x64x64xf32>
    %337 = vector.shape_cast %336 : vector<1x64x64xf32> to vector<64x64xf32>
    %cst_258 = arith.constant dense<0.000000e+00> : vector<16x64xf32>
    %338 = tpu.matmul %335, %337, %cst_258 {dimension_numbers = #tpu.dot_dimension_numbers<[1], [0], [0], [1], [0, 0, 1, 1], [], []>} : vector<16x64xf32>, vector<64x64xf32>, vector<16x64xf32> -> vector<16x64xf32>
    %339 = arith.addf %334, %338 : vector<16x64xf32>
    %340 = vector.extract_strided_slice %300 {offsets = [128, 0], sizes = [16, 64], strides = [1, 1]} : vector<144x64xf32> to vector<16x64xf32>
    %c8_259 = arith.constant 8 : index
    %c0_260 = arith.constant 0 : index
    %c0_261 = arith.constant 0 : index
    %341 = vector.load %arg19[%c8_259, %c0_260, %c0_261] : memref<9x64x64xf32, #tpu.memory_space<vmem>>, vector<1x64x64xf32>
    %342 = vector.shape_cast %341 : vector<1x64x64xf32> to vector<64x64xf32>
    %cst_262 = arith.constant dense<0.000000e+00> : vector<16x64xf32>
    %343 = tpu.matmul %340, %342, %cst_262 {dimension_numbers = #tpu.dot_dimension_numbers<[1], [0], [0], [1], [0, 0, 1, 1], [], []>} : vector<16x64xf32>, vector<64x64xf32>, vector<16x64xf32> -> vector<16x64xf32>
    %344 = arith.addf %339, %343 : vector<16x64xf32>
    %345 = vector.broadcast %299 : vector<16x1xf32> to vector<16x64xf32>
    %346 = arith.addf %344, %345 : vector<16x64xf32>
    %c0_263 = arith.constant 0 : index
    %c0_264 = arith.constant 0 : index
    %347 = vector.load %arg16[%c0_263, %c0_264] : memref<16x4xf32, #tpu.memory_space<vmem>>, vector<16x4xf32>
    %c0_265 = arith.constant 0 : index
    %c0_266 = arith.constant 0 : index
    %348 = vector.load %arg17[%c0_265, %c0_266] : memref<16x4xf32, #tpu.memory_space<vmem>>, vector<16x4xf32>
    %cst_267 = arith.constant dense<0.000000e+00> : vector<16xf32>
    %349 = vector.multi_reduction <add>, %297, %cst_267 [1] : vector<16x64xf32> to vector<16xf32>
    %350 = vector.shape_cast %349 : vector<16xf32> to vector<16x1xf32>
    %cst_268 = arith.constant 6.400000e+01 : f32
    %351 = vector.broadcast %cst_268 : f32 to vector<16x1xf32>
    %352 = arith.divf %350, %351 : vector<16x1xf32>
    %353 = vector.broadcast %352 : vector<16x1xf32> to vector<16x4xf32>
    %354 = arith.mulf %347, %353 : vector<16x4xf32>
    %cst_269 = arith.constant dense<0.000000e+00> : vector<4xf32>
    %355 = vector.multi_reduction <add>, %354, %cst_269 [0] : vector<16x4xf32> to vector<4xf32>
    %356 = vector.shape_cast %355 : vector<4xf32> to vector<1x4xf32>
    %cst_270 = arith.constant 0.000000e+00 : f32
    %357 = vector.broadcast %cst_270 : f32 to vector<1x4xf32>
    %358 = arith.cmpf oge, %356, %357 : vector<1x4xf32>
    %cst_271 = arith.constant 0.00999999977 : f32
    %359 = vector.broadcast %cst_271 : f32 to vector<1x4xf32>
    %360 = arith.mulf %359, %356 : vector<1x4xf32>
    %361 = arith.select %358, %356, %360 : vector<1x4xi1>, vector<1x4xf32>
    %362 = vector.broadcast %361 : vector<1x4xf32> to vector<16x4xf32>
    %363 = arith.mulf %348, %362 : vector<16x4xf32>
    %cst_272 = arith.constant dense<0.000000e+00> : vector<16xf32>
    %364 = vector.multi_reduction <add>, %363, %cst_272 [1] : vector<16x4xf32> to vector<16xf32>
    %365 = vector.shape_cast %364 : vector<16xf32> to vector<16x1xf32>
    %cst_273 = arith.constant 0.000000e+00 : f32
    %366 = vector.broadcast %cst_273 : f32 to vector<16x1xf32>
    %367 = arith.subf %366, %365 : vector<16x1xf32>
    %368 = math.exp %367 : vector<16x1xf32>
    %cst_274 = arith.constant 1.000000e+00 : f32
    %369 = vector.broadcast %cst_274 : f32 to vector<16x1xf32>
    %370 = arith.addf %369, %368 : vector<16x1xf32>
    %cst_275 = arith.constant 1.000000e+00 : f32
    %371 = vector.broadcast %cst_275 : f32 to vector<16x1xf32>
    %372 = arith.divf %371, %370 : vector<16x1xf32>
    %373 = vector.broadcast %372 : vector<16x1xf32> to vector<16x64xf32>
    %374 = arith.mulf %297, %373 : vector<16x64xf32>
    %375 = arith.addf %374, %346 : vector<16x64xf32>
    %cst_276 = arith.constant 0.000000e+00 : f32
    %376 = vector.broadcast %cst_276 : f32 to vector<16x64xf32>
    %377 = arith.cmpf oge, %375, %376 : vector<16x64xf32>
    %cst_277 = arith.constant 0.00999999977 : f32
    %378 = vector.broadcast %cst_277 : f32 to vector<16x64xf32>
    %379 = arith.mulf %378, %375 : vector<16x64xf32>
    %380 = arith.select %377, %375, %379 : vector<16x64xi1>, vector<16x64xf32>
    %c0_278 = arith.constant 0 : index
    %c0_279 = arith.constant 0 : index
    %381 = vector.load %arg21[%c0_278, %c0_279] : memref<64x16xf32, #tpu.memory_space<vmem>>, vector<64x16xf32>
    %cst_280 = arith.constant dense<0.000000e+00> : vector<16x16xf32>
    %382 = tpu.matmul %380, %381, %cst_280 {dimension_numbers = #tpu.dot_dimension_numbers<[1], [0], [0], [1], [0, 0, 1, 1], [], []>} : vector<16x64xf32>, vector<64x16xf32>, vector<16x16xf32> -> vector<16x16xf32>
    %c0_281 = arith.constant 0 : index
    %c0_282 = arith.constant 0 : index
    %c0_283 = arith.constant 0 : index
    %383 = vector.load %arg22[%c0_281, %c0_282, %c0_283] : memref<1x16x16xf32, #tpu.memory_space<vmem>>, vector<1x16x16xf32>
    %384 = vector.shape_cast %383 : vector<1x16x16xf32> to vector<16x16xf32>
    %385 = vector.shape_cast %382 : vector<16x16xf32> to vector<1x16x16xf32>
    tpu.vector_store %arg22[%c0_281, %c0_282, %c0_283], %385 {strides = array<i32>} : memref<1x16x16xf32, #tpu.memory_space<vmem>>, vector<1x16x16xf32>,
    return
  }
  func.func @transform_0(%arg0: i32) -> (i32, i32, i32) {
    %c0_i32 = arith.constant 0 : i32
    %c0_i32_0 = arith.constant 0 : i32
    %c0_i32_1 = arith.constant 0 : i32
    return %arg0, %c0_i32, %c0_i32_0 : i32, i32, i32
  }
  func.func @transform_1(%arg0: i32) -> (i32, i32) {
    %c0_i32 = arith.constant 0 : i32
    %c0_i32_0 = arith.constant 0 : i32
    %c0_i32_1 = arith.constant 0 : i32
    return %c0_i32, %c0_i32_0 : i32, i32
  }
  func.func @transform_2(%arg0: i32) -> (i32, i32) {
    %c0_i32 = arith.constant 0 : i32
    %c0_i32_0 = arith.constant 0 : i32
    %c0_i32_1 = arith.constant 0 : i32
    return %c0_i32, %c0_i32_0 : i32, i32
  }
  func.func @transform_3(%arg0: i32) -> (i32, i32) {
    %c0_i32 = arith.constant 0 : i32
    %c0_i32_0 = arith.constant 0 : i32
    %c0_i32_1 = arith.constant 0 : i32
    return %c0_i32, %c0_i32_0 : i32, i32
  }
  func.func @transform_4(%arg0: i32) -> (i32, i32) {
    %c0_i32 = arith.constant 0 : i32
    %c0_i32_0 = arith.constant 0 : i32
    %c0_i32_1 = arith.constant 0 : i32
    return %c0_i32, %c0_i32_0 : i32, i32
  }
  func.func @transform_5(%arg0: i32) -> (i32, i32) {
    %c0_i32 = arith.constant 0 : i32
    %c0_i32_0 = arith.constant 0 : i32
    %c0_i32_1 = arith.constant 0 : i32
    return %c0_i32, %c0_i32_0 : i32, i32
  }
  func.func @transform_6(%arg0: i32) -> (i32, i32) {
    %c0_i32 = arith.constant 0 : i32
    %c0_i32_0 = arith.constant 0 : i32
    %c0_i32_1 = arith.constant 0 : i32
    return %c0_i32, %c0_i32_0 : i32, i32
  }
  func.func @transform_7(%arg0: i32) -> (i32, i32) {
    %c0_i32 = arith.constant 0 : i32
    %c0_i32_0 = arith.constant 0 : i32
    %c0_i32_1 = arith.constant 0 : i32
    return %c0_i32, %c0_i32_0 : i32, i32
  }
  func.func @transform_8(%arg0: i32) -> (i32, i32) {
    %c0_i32 = arith.constant 0 : i32
    %c0_i32_0 = arith.constant 0 : i32
    %c0_i32_1 = arith.constant 0 : i32
    return %c0_i32, %c0_i32_0 : i32, i32
  }
  func.func @transform_9(%arg0: i32) -> (i32, i32) {
    %c0_i32 = arith.constant 0 : i32
    %c0_i32_0 = arith.constant 0 : i32
    %c0_i32_1 = arith.constant 0 : i32
    return %c0_i32, %c0_i32_0 : i32, i32
  }
  func.func @transform_10(%arg0: i32) -> (i32, i32) {
    %c0_i32 = arith.constant 0 : i32
    %c0_i32_0 = arith.constant 0 : i32
    %c0_i32_1 = arith.constant 0 : i32
    return %c0_i32, %c0_i32_0 : i32, i32
  }
  func.func @transform_11(%arg0: i32) -> (i32, i32) {
    %c0_i32 = arith.constant 0 : i32
    %c0_i32_0 = arith.constant 0 : i32
    %c0_i32_1 = arith.constant 0 : i32
    return %c0_i32, %c0_i32_0 : i32, i32
  }
  func.func @transform_12(%arg0: i32) -> (i32, i32) {
    %c0_i32 = arith.constant 0 : i32
    %c0_i32_0 = arith.constant 0 : i32
    %c0_i32_1 = arith.constant 0 : i32
    return %c0_i32, %c0_i32_0 : i32, i32
  }
  func.func @transform_13(%arg0: i32) -> (i32, i32) {
    %c0_i32 = arith.constant 0 : i32
    %c0_i32_0 = arith.constant 0 : i32
    %c0_i32_1 = arith.constant 0 : i32
    return %c0_i32, %c0_i32_0 : i32, i32
  }
  func.func @transform_14(%arg0: i32) -> (i32, i32) {
    %c0_i32 = arith.constant 0 : i32
    %c0_i32_0 = arith.constant 0 : i32
    %c0_i32_1 = arith.constant 0 : i32
    return %c0_i32, %c0_i32_0 : i32, i32
  }
  func.func @transform_15(%arg0: i32) -> (i32, i32) {
    %c0_i32 = arith.constant 0 : i32
    %c0_i32_0 = arith.constant 0 : i32
    %c0_i32_1 = arith.constant 0 : i32
    return %c0_i32, %c0_i32_0 : i32, i32
  }
  func.func @transform_16(%arg0: i32) -> (i32, i32) {
    %c0_i32 = arith.constant 0 : i32
    %c0_i32_0 = arith.constant 0 : i32
    %c0_i32_1 = arith.constant 0 : i32
    return %c0_i32, %c0_i32_0 : i32, i32
  }
  func.func @transform_17(%arg0: i32) -> (i32, i32, i32) {
    %c0_i32 = arith.constant 0 : i32
    %c0_i32_0 = arith.constant 0 : i32
    %c0_i32_1 = arith.constant 0 : i32
    %c0_i32_2 = arith.constant 0 : i32
    return %c0_i32, %c0_i32_0, %c0_i32_1 : i32, i32, i32
  }
  func.func @transform_18(%arg0: i32) -> (i32, i32, i32) {
    %c0_i32 = arith.constant 0 : i32
    %c0_i32_0 = arith.constant 0 : i32
    %c0_i32_1 = arith.constant 0 : i32
    %c0_i32_2 = arith.constant 0 : i32
    return %c0_i32, %c0_i32_0, %c0_i32_1 : i32, i32, i32
  }
  func.func @transform_19(%arg0: i32) -> (i32, i32) {
    %c0_i32 = arith.constant 0 : i32
    %c0_i32_0 = arith.constant 0 : i32
    %c0_i32_1 = arith.constant 0 : i32
    return %c0_i32, %c0_i32_0 : i32, i32
  }
  func.func @transform_20(%arg0: i32) -> (i32, i32) {
    %c0_i32 = arith.constant 0 : i32
    %c0_i32_0 = arith.constant 0 : i32
    %c0_i32_1 = arith.constant 0 : i32
    return %c0_i32, %c0_i32_0 : i32, i32
  }
  func.func @transform_21(%arg0: i32) -> (i32, i32, i32) {
    %c0_i32 = arith.constant 0 : i32
    %c0_i32_0 = arith.constant 0 : i32
    %c0_i32_1 = arith.constant 0 : i32
    return %arg0, %c0_i32, %c0_i32_0 : i32, i32, i32
  }
}

</mosaic_0001>

<llo_original>
// kernel: mul.37
$region0: #{mul.37}
  %s0 = inlined_call_operand.vmem [shape: f32[9,16], index: 0, kind: input, shape index: {}]
  %s1 = inlined_call_operand.vmem [shape: f32[144], index: 1, kind: output, shape index: {}]
  $region1: #{mul.37} parent=0
    #allocation0 [shape = 'u8[4096]{0}', space=vmem, size = 0x1000, scoped, tag = 'scoped mem for output reshape']
    %s2 = smov 3
    %v3 = vld [vmem:[%s0] ss:$8 sm:%s2]
    %vm4 = vcmask 130048
    %5 = vst.msk [vmem:[#allocation0] sm:$0x3] %vm4, %v3
    %s6 = scalar_lea.vmem %s0, 7
    %v7 = vld [vmem:[%s6] sm:$0x1]
    %8 = vrot.lane.b32.xlu0 %v7, 112
    %v9 = vpop.permute.xlu0 %8
    %vm10 = vcmask 1048448
    %11 = vst.msk [vmem:[#allocation0] sm:$0x1] %vm10, %v9
    %s12 = scalar_lea.vmem %s0, 6
    %v13 = vld [vmem:[%s12] sm:$0x1]
    %14 = vrot.lane.b32.xlu0 %v13, 96
    %v15 = vpop.permute.xlu0 %14
    %vm16 = vcmask 917248
    %17 = vst.msk [vmem:[#allocation0] sm:$0x1] %vm16, %v15
    %s18 = scalar_lea.vmem %s0, 5
    %v19 = vld [vmem:[%s18] sm:$0x1]
    %20 = vrot.lane.b32.xlu0 %v19, 80
    %v21 = vpop.permute.xlu0 %20
    %vm22 = vcmask 786048
    %23 = vst.msk [vmem:[#allocation0] sm:$0x1] %vm22, %v21
    %s24 = scalar_lea.vmem %s0, 4
    %v25 = vld [vmem:[%s24] sm:$0x1]
    %26 = vrot.lane.b32.xlu0 %v25, 64
    %v27 = vpop.permute.xlu0 %26
    %vm28 = vcmask 654848
    %29 = vst.msk [vmem:[#allocation0] sm:$0x1] %vm28, %v27
    %s30 = scalar_lea.vmem %s0, 3
    %v31 = vld [vmem:[%s30] sm:$0x1]
    %32 = vrot.lane.b32.xlu0 %v31, 48
    %v33 = vpop.permute.xlu0 %32
    %vm34 = vcmask 523648
    %35 = vst.msk [vmem:[#allocation0] sm:$0x1] %vm34, %v33
    %s36 = scalar_lea.vmem %s0, 2
    %v37 = vld [vmem:[%s36] sm:$0x1]
    %38 = vrot.lane.b32.xlu0 %v37, 32
    %v39 = vpop.permute.xlu0 %38
    %vm40 = vcmask 392448
    %41 = vst.msk [vmem:[#allocation0] sm:$0x1] %vm40, %v39
    %s42 = scalar_lea.vmem %s0, 1
    %v43 = vld [vmem:[%s42] sm:$0x1]
    %44 = vrot.lane.b32.xlu0 %v43, 16
    %v45 = vpop.permute.xlu0 %44
    %vm46 = vcmask 261248
    %47 = vst.msk [vmem:[#allocation0] sm:$0x1] %vm46, %v45
    %s49 = sshllo.u32 0, 2
    %v51 = vld [vmem:[#allocation0] sm:%s49]
    %s52 = sshllo.u32 0, 2
    %53 = vst [vmem:[%s1] sm:%s52] %v51

// kernel: tile.48
$region0: #{tile.48}
  #allocation2 [shape = 's32[1]{0}', space=sflag, size = 0x4, scoped, tag = 'scoped memory for tile.48']
  %s0 = inlined_call_operand.hbm [shape: f32[16], index: 0, kind: input, shape index: {}]
  %s1 = inlined_call_operand.vmem [shape: f32[9,16], index: 1, kind: output, shape index: {}]
  $region1: #{tile.48} parent=0
    #allocation0 [shape = 'u8[512]{0}', space=vmem, size = 0x400, scoped, tag = 'operand span for operand 0']
    #allocation1 [shape = 's32[1]{0}', space=sflag, size = 0x4, scoped, tag = 'scoped memory for tile.48']
    %2 = vsyncpa [#allocation1], 0
    // Predicated region
    $region2: #{tile.48} parent=1 // pred_check
      _
    $region3: #{tile.48} parent=1 // pred_check_branch
      %4 = sbr.rel (0) target = $region5
    $region4: #{tile.48} parent=1 // pred_region
      %s6 = ssub.s32 16, 16
      %7 = vsyncadd [#allocation1], %s6
      %s9 = sshll.u32 [#allocation0], 4
      %s10 = int_to_ptr.vmem [resolvable:$true] %s9
      %12 = dma.hbm_to_vmem [thread:$0]  %s0, 16, %s10, [#allocation1]
    $region5: #{tile.48} parent=1 // pred_fallthru
      _
    // Predicated region
    $region6: #{tile.48} parent=1 // pred_check
      _
    $region7: #{tile.48} parent=1 // pred_check_branch
      %14 = sbr.rel (0) target = $region9
    $region8: #{tile.48} parent=1 // pred_region
      %15 = dma.done [#allocation1], 16
    $region9: #{tile.48} parent=1 // pred_fallthru
      _
    %v16 = vld [vmem:[#allocation0] ss:$0 sm:$0xff]
    %17 = vst [vmem:[%s1] sm:$0xff] %v16
    %s18 = scalar_lea.vmem %s1, 8
    %19 = vst [vmem:[%s18] sm:$0xff] %v16
    %20 = vsyncpa [#allocation1], 1

// kernel: mul.29
$region0: #{mul.29}
  %s0 = inlined_call_operand.vmem [shape: f32[9,8], index: 0, kind: input, shape index: {}]
  %s1 = inlined_call_operand.vmem [shape: f32[72], index: 1, kind: output, shape index: {}]
  $region1: #{mul.29} parent=0
    #allocation0 [shape = 'u8[4096]{0}', space=vmem, size = 0x1000, scoped, tag = 'scoped mem for output reshape']
    %v2 = vld [vmem:[%s0] sm:$0x1]
    %vm3 = vcmask 64512
    %4 = vst.msk [vmem:[#allocation0] sm:$0x1] %vm3, %v2
    %s5 = scalar_lea.vmem %s0, 8
    %v6 = vld [vmem:[%s5] sm:$0x1]
    %7 = vrot.lane.b32.xlu0 %v6, 64
    %v8 = vpop.permute.xlu0 %7
    %vm9 = vcmask 589312
    %10 = vst.msk [vmem:[#allocation0] sm:$0x1] %vm9, %v8
    %s11 = scalar_lea.vmem %s0, 7
    %v12 = vld [vmem:[%s11] sm:$0x1]
    %13 = vrot.lane.b32.xlu0 %v12, 56
    %v14 = vpop.permute.xlu0 %13
    %vm15 = vcmask 523712
    %16 = vst.msk [vmem:[#allocation0] sm:$0x1] %vm15, %v14
    %s17 = scalar_lea.vmem %s0, 6
    %v18 = vld [vmem:[%s17] sm:$0x1]
    %19 = vrot.lane.b32.xlu0 %v18, 48
    %v20 = vpop.permute.xlu0 %19
    %vm21 = vcmask 458112
    %22 = vst.msk [vmem:[#allocation0] sm:$0x1] %vm21, %v20
    %s23 = scalar_lea.vmem %s0, 5
    %v24 = vld [vmem:[%s23] sm:$0x1]
    %25 = vrot.lane.b32.xlu0 %v24, 40
    %v26 = vpop.permute.xlu0 %25
    %vm27 = vcmask 392512
    %28 = vst.msk [vmem:[#allocation0] sm:$0x1] %vm27, %v26
    %s29 = scalar_lea.vmem %s0, 4
    %v30 = vld [vmem:[%s29] sm:$0x1]
    %31 = vrot.lane.b32.xlu0 %v30, 32
    %v32 = vpop.permute.xlu0 %31
    %vm33 = vcmask 326912
    %34 = vst.msk [vmem:[#allocation0] sm:$0x1] %vm33, %v32
    %s35 = scalar_lea.vmem %s0, 3
    %v36 = vld [vmem:[%s35] sm:$0x1]
    %37 = vrot.lane.b32.xlu0 %v36, 24
    %v38 = vpop.permute.xlu0 %37
    %vm39 = vcmask 261312
    %40 = vst.msk [vmem:[#allocation0] sm:$0x1] %vm39, %v38
    %s41 = scalar_lea.vmem %s0, 2
    %v42 = vld [vmem:[%s41] sm:$0x1]
    %43 = vrot.lane.b32.xlu0 %v42, 16
    %v44 = vpop.permute.xlu0 %43
    %vm45 = vcmask 195712
    %46 = vst.msk [vmem:[#allocation0] sm:$0x1] %vm45, %v44
    %s47 = scalar_lea.vmem %s0, 1
    %v48 = vld [vmem:[%s47] sm:$0x1]
    %49 = vrot.lane.b32.xlu0 %v48, 8
    %v50 = vpop.permute.xlu0 %49
    %vm51 = vcmask 130112
    %52 = vst.msk [vmem:[#allocation0] sm:$0x1] %vm51, %v50
    %s54 = sshllo.u32 0, 1
    %v56 = vld [vmem:[#allocation0] sm:%s54]
    %s57 = sshllo.u32 0, 1
    %58 = vst [vmem:[%s1] sm:%s57] %v56

// kernel: tile.38
$region0: #{tile.38}
  #allocation2 [shape = 's32[1]{0}', space=sflag, size = 0x4, scoped, tag = 'scoped memory for tile.38']
  %s0 = inlined_call_operand.hbm [shape: f32[8], index: 0, kind: input, shape index: {}]
  %s1 = inlined_call_operand.vmem [shape: f32[9,8], index: 1, kind: output, shape index: {}]
  $region1: #{tile.38} parent=0
    #allocation0 [shape = 'u8[512]{0}', space=vmem, size = 0x400, scoped, tag = 'operand span for operand 0']
    #allocation1 [shape = 's32[1]{0}', space=sflag, size = 0x4, scoped, tag = 'scoped memory for tile.38']
    %2 = vsyncpa [#allocation1], 0
    // Predicated region
    $region2: #{tile.38} parent=1 // pred_check
      _
    $region3: #{tile.38} parent=1 // pred_check_branch
      %4 = sbr.rel (0) target = $region5
    $region4: #{tile.38} parent=1 // pred_region
      %s6 = ssub.s32 16, 16
      %7 = vsyncadd [#allocation1], %s6
      %s9 = sshll.u32 [#allocation0], 4
      %s10 = int_to_ptr.vmem [resolvable:$true] %s9
      %12 = dma.hbm_to_vmem [thread:$0]  %s0, 16, %s10, [#allocation1]
    $region5: #{tile.38} parent=1 // pred_fallthru
      _
    // Predicated region
    $region6: #{tile.38} parent=1 // pred_check
      _
    $region7: #{tile.38} parent=1 // pred_check_branch
      %14 = sbr.rel (0) target = $region9
    $region8: #{tile.38} parent=1 // pred_region
      %15 = dma.done [#allocation1], 16
    $region9: #{tile.38} parent=1 // pred_fallthru
      _
    %v16 = vld [vmem:[#allocation0] ss:$0 sm:$0xff]
    %17 = vst [vmem:[%s1] sm:$0xff] %v16
    %s18 = scalar_lea.vmem %s1, 8
    %19 = vst [vmem:[%s18] sm:$0xff] %v16
    %20 = vsyncpa [#allocation1], 1

</llo_original>
